<compile_context>
chip_gen: v7x
topology: tpu7x:2x2x1
jax: 0.10.0
libtpu: 0.0.40
codegen_flags: <defaults>
</compile_context>

<pallas_src>
import functools

import jax
import jax.numpy as jnp
from jax import lax
from jax.experimental import pallas as pl
from jax.experimental.pallas import tpu as pltpu


# -------- fused conv3x3 + bias + ReLU + 2x2 pool-max kernel ------------------

def _conv_relu_poolmax_kernel(xc_ref, xh_ref, w_ref, b_ref, o_ref, *,
                              wp, tm, cin):
    """One lane-dense tile of the flattened zero-padded grid.

    xc: [Cin, tm] bf16 current tile; xh: [Cin, 128] bf16 halo (next lanes).
    w:  [Cout, 9] f32 if cin == 1 else [9, Cout, Cin] bf16 (tap-major).
    b:  [Cout, 1] f32.
    o:  [Cout, tm] bf16 -- o[:, m] = max over the 2x2 pool window anchored at
        padded-grid flat position m of ReLU(conv3x3) (valid lanes are picked
        downstream).
    """
    x = jnp.concatenate([xc_ref[...], xh_ref[...]], axis=1)       # [Cin, tm+128]
    tme = tm + wp + 1                                             # extra cols for pool taps
    shifts = tuple(kh * wp + kw for kh in range(3) for kw in range(3))

    acc = None
    if cin == 1:
        # conv1: a K=9, M=8 matmul would waste the MXU -> 9 VPU broadcast-FMAs.
        xr = x.astype(jnp.float32)                                # [1, tm+128]
        for t, d in enumerate(shifts):
            term = w_ref[:, t:t + 1] * xr[:, d:d + tme]           # [Cout, tme] f32
            acc = term if acc is None else acc + term
    else:
        # 9 direct small dots: no im2col staging / concat copies.
        for t, d in enumerate(shifts):
            term = jnp.dot(w_ref[t], x[:, d:d + tme],             # [Cout,Cin]@[Cin,tme]
                           preferred_element_type=jnp.float32)
            acc = term if acc is None else acc + term

    y = jnp.maximum(acc + b_ref[...], 0.0)                        # bias + ReLU (f32)
    # fused 2x2 max-pool taps: (h, w), (h, w+1), (h+1, w), (h+1, w+1)
    p = jnp.maximum(jnp.maximum(y[:, 0:tm], y[:, 1:tm + 1]),
                    jnp.maximum(y[:, wp:tm + wp], y[:, wp + 1:tm + wp + 1]))
    o_ref[...] = p.astype(o_ref.dtype)


def _pick_tm(mp):
    # Largest lane-dense tile (multiple of 128, <= 2048) that still yields
    # >= 2 grid steps (v7x megacore) and covers mp with minimal junk tail.
    half = pl.cdiv(mp, 2)
    half_r = pl.cdiv(half, 128) * 128
    return max(128, min(2048, half_r))


def conv3x3_relu_pool(x, w, b):
    """x: [Cin, B, H, W] channel-major (H, W even); w: [Cout, Cin, 3, 3]; b: [Cout].

    Returns maxpool2x2(ReLU(conv3x3_pad1(x))): [Cout, B, H//2, W//2] (bf16)."""
    Cin, B, H, W = x.shape
    Cout = w.shape[0]
    assert H % 2 == 0 and W % 2 == 0, "2x2/stride-2 pool assumes even H, W"
    Hp, Wp = H + 2, W + 2
    # 128-lane halo must cover the conv stencil + pool reach: 3*Wp + 2 < 128.
    assert 3 * Wp + 3 <= 128, "spatial width too large for the 128-lane halo"
    # TODO(synk): for very large activations, fold the bf16 cast + zero-pad
    # into the kernel (masked loads) to drop this XLA-side pre-pass.
    mp = B * Hp * Wp
    tm = _pick_tm(mp)
    n_tiles = pl.cdiv(mp, tm)
    nt = n_tiles * tm

    xp = jnp.pad(x.astype(jnp.bfloat16), ((0, 0), (0, 0), (1, 1), (1, 1)))
    xf = jnp.pad(xp.reshape(Cin, mp), ((0, 0), (0, nt + 128 - mp)))

    if Cin == 1:
        wk = w.reshape(Cout, 9).astype(jnp.float32)               # [Cout, taps]
        w_spec = pl.BlockSpec((Cout, 9), lambda i: (0, 0))
    else:
        wk = jnp.transpose(w, (2, 3, 0, 1)).reshape(9, Cout, Cin).astype(jnp.bfloat16)
        w_spec = pl.BlockSpec((9, Cout, Cin), lambda i: (0, 0, 0))
    b2 = b.reshape(Cout, 1).astype(jnp.float32)

    blocks_per_tile = tm // 128
    pe = pl.pallas_call(
        functools.partial(_conv_relu_poolmax_kernel, wp=Wp, tm=tm, cin=Cin),
        out_shape=jax.ShapeDtypeStruct((Cout, nt), jnp.bfloat16),
        grid=(n_tiles,),
        in_specs=[
            pl.BlockSpec((Cin, tm), lambda i: (0, i)),                          # current tile
            pl.BlockSpec((Cin, 128), lambda i: (0, (i + 1) * blocks_per_tile)),  # 128-lane halo
            w_spec,                                                             # resident weights
            pl.BlockSpec((Cout, 1), lambda i: (0, 0)),                          # bias
        ],
        out_specs=pl.BlockSpec((Cout, tm), lambda i: (0, i)),                   # lane-dense store
        compiler_params=pltpu.CompilerParams(
            dimension_semantics=("parallel",)),
    )(xf, xf, wk, b2)

    # Compact the valid pooled lanes (even rows/cols of the valid region) on
    # the 4x-smaller result; pure XLA data movement on a tiny tensor.
    return pe[:, :mp].reshape(Cout, B, Hp, Wp)[:, :, 0:H:2, 0:W:2]


# ------------------------------- final Linear ---------------------------------

def _linear_kernel(a_ref, w_ref, b_ref, o_ref):
    # a: [B, K] bf16; w: [N, K] bf16 (PyTorch layout) -> contract over K here.
    acc = lax.dot_general(a_ref[...], w_ref[...],
                          dimension_numbers=(((1,), (1,)), ((), ())),
                          preferred_element_type=jnp.float32)
    o_ref[...] = acc + b_ref[...]


def linear(a, w, b):
    # a: [B, K]; w: [N, K] (PyTorch layout); b: [N]  ->  [B, N] f32.
    # Negligible FLOPs; one small block, no wrapper-side weight transpose.
    B, K = a.shape
    N = w.shape[0]
    return pl.pallas_call(
        _linear_kernel,
        out_shape=jax.ShapeDtypeStruct((B, N), jnp.float32),
        grid=(1,),
        in_specs=[
            pl.BlockSpec((B, K), lambda i: (0, 0)),
            pl.BlockSpec((N, K), lambda i: (0, 0)),
            pl.BlockSpec((1, N), lambda i: (0, 0)),
        ],
        out_specs=pl.BlockSpec((B, N), lambda i: (0, 0)),
    )(a.astype(jnp.bfloat16), w.astype(jnp.bfloat16),
      b.reshape(1, N).astype(jnp.float32))


# -------------------------------- forward pass --------------------------------

def cnn_forward(x, params):
    # x: [B, 1, H, W] NCHW (PyTorch layout).  Internally channel-major.
    B = x.shape[0]
    xc = jnp.transpose(x, (1, 0, 2, 3))                                # [1, B, 28, 28]
    h1 = conv3x3_relu_pool(xc, params["conv1_w"], params["conv1_b"])   # [8, B, 14, 14]
    h2 = conv3x3_relu_pool(h1, params["conv2_w"], params["conv2_b"])   # [16, B, 7, 7]
    # flatten in PyTorch (c, h, w) feature order for fc1.
    a = jnp.transpose(h2, (1, 0, 2, 3)).reshape(B, -1)                 # [B, 16*7*7]
    return linear(a, params["fc1_w"], params["fc1_b"])                 # [B, 10] f32


def init_params(key):
    # Deterministic init mimicking PyTorch's U(-1/sqrt(fan_in), 1/sqrt(fan_in)).
    ks = jax.random.split(key, 6)

    def u(k, shape, fan_in):
        bound = 1.0 / jnp.sqrt(float(fan_in))
        return jax.random.uniform(k, shape, jnp.float32, -bound, bound)

    return {
        "conv1_w": u(ks[0], (8, 1, 3, 3), 1 * 9),
        "conv1_b": u(ks[1], (8,), 1 * 9),
        "conv2_w": u(ks[2], (16, 8, 3, 3), 8 * 9),
        "conv2_b": u(ks[3], (16,), 8 * 9),
        "fc1_w":  u(ks[4], (10, 16 * 7 * 7), 16 * 7 * 7),
        "fc1_b":  u(ks[5], (10,), 16 * 7 * 7),
    }


# Pure-JAX float32 reference (PyTorch forward semantics) for a sanity check.
def cnn_reference(x, params):
    def conv(h, w, b):
        dn = lax.conv_dimension_numbers(h.shape, w.shape, ("NCHW", "OIHW", "NCHW"))
        y = lax.conv_general_dilated(h, w, (1, 1), ((1, 1), (1, 1)),
                                     dimension_numbers=dn)
        return jax.nn.relu(y + b[None, :, None, None])

    def pool(h):
        return lax.reduce_window(h, -jnp.inf, lax.max,
                                 (1, 1, 2, 2), (1, 1, 2, 2), "VALID")

    h = pool(conv(x, params["conv1_w"], params["conv1_b"]))
    h = pool(conv(h, params["conv2_w"], params["conv2_b"]))
    a = h.reshape(h.shape[0], -1)
    return a @ params["fc1_w"].T + params["fc1_b"][None, :]


if __name__ == "__main__":
    params = init_params(jax.random.PRNGKey(42))
    x = jax.random.normal(jax.random.PRNGKey(0), (2, 1, 28, 28), jnp.float32)
    out = jax.jit(cnn_forward)(x, params)
    jax.block_until_ready(out)
    assert out.shape == (2, 10) and out.dtype == jnp.float32
    # bf16 activations/weights inside the kernels -> allow a small drift vs f32.
    ref = cnn_reference(x, params)
    err = float(jnp.max(jnp.abs(out - ref)))
    assert err < 0.1, f"max abs error vs f32 reference too large: {err}"
    print("KERNEL_OK")
</pallas_src>

<mosaic_0001>
module attributes {stable_mosaic.version = 11 : i64} {
  func.func @_conv_relu_poolmax_kernel(%arg0: i32, %arg1: memref<1x1024xbf16, #tpu.memory_space<vmem>>, %arg2: memref<1x128xbf16, #tpu.memory_space<vmem>>, %arg3: memref<8x9xf32, #tpu.memory_space<vmem>>, %arg4: memref<8x1xf32, #tpu.memory_space<vmem>>, %arg5: memref<8x1024xbf16, #tpu.memory_space<vmem>>) attributes {dimension_semantics = [#tpu.dimension_semantics<parallel>], iteration_bounds = array<i64: 2>, scalar_prefetch = 0 : i64, scratch_operands = 0 : i64, tpu.core_type = #tpu.core_type<tc>, window_params = [{transform_indices = @transform_0, window_bounds = array<i64: 1, 1024>}, {transform_indices = @transform_1, window_bounds = array<i64: 1, 128>}, {pipeline_mode = #tpu.pipeline_mode<synchronous>, transform_indices = @transform_2, window_bounds = array<i64: 8, 9>}, {pipeline_mode = #tpu.pipeline_mode<synchronous>, transform_indices = @transform_3, window_bounds = array<i64: 8, 1>}, {transform_indices = @transform_4, window_bounds = array<i64: 8, 1024>}]} {
    %c0 = arith.constant 0 : index
    %c0_0 = arith.constant 0 : index
    %0 = vector.load %arg1[%c0, %c0_0] : memref<1x1024xbf16, #tpu.memory_space<vmem>>, vector<1x1024xbf16>
    %c0_1 = arith.constant 0 : index
    %c0_2 = arith.constant 0 : index
    %1 = vector.load %arg2[%c0_1, %c0_2] : memref<1x128xbf16, #tpu.memory_space<vmem>>, vector<1x128xbf16>
    %2 = tpu.concatenate %0, %1 in 1 : vector<1x1024xbf16>, vector<1x128xbf16> -> vector<1x1152xbf16>
    %3 = arith.extf %2 : vector<1x1152xbf16> to vector<1x1152xf32>
    %c0_3 = arith.constant 0 : index
    %c0_4 = arith.constant 0 : index
    %4 = vector.load %arg3[%c0_3, %c0_4] : memref<8x9xf32, #tpu.memory_space<vmem>>, vector<8x1xf32>
    %5 = vector.extract_strided_slice %3 {offsets = [0, 0], sizes = [1, 1055], strides = [1, 1]} : vector<1x1152xf32> to vector<1x1055xf32>
    %6 = vector.broadcast %4 : vector<8x1xf32> to vector<8x1055xf32>
    %7 = vector.broadcast %5 : vector<1x1055xf32> to vector<8x1055xf32>
    %8 = arith.mulf %6, %7 : vector<8x1055xf32>
    %c0_5 = arith.constant 0 : index
    %c1 = arith.constant 1 : index
    %9 = vector.load %arg3[%c0_5, %c1] : memref<8x9xf32, #tpu.memory_space<vmem>>, vector<8x1xf32>
    %10 = vector.extract_strided_slice %3 {offsets = [0, 1], sizes = [1, 1055], strides = [1, 1]} : vector<1x1152xf32> to vector<1x1055xf32>
    %11 = vector.broadcast %9 : vector<8x1xf32> to vector<8x1055xf32>
    %12 = vector.broadcast %10 : vector<1x1055xf32> to vector<8x1055xf32>
    %13 = arith.mulf %11, %12 : vector<8x1055xf32>
    %14 = arith.addf %8, %13 : vector<8x1055xf32>
    %c0_6 = arith.constant 0 : index
    %c2 = arith.constant 2 : index
    %15 = vector.load %arg3[%c0_6, %c2] : memref<8x9xf32, #tpu.memory_space<vmem>>, vector<8x1xf32>
    %16 = vector.extract_strided_slice %3 {offsets = [0, 2], sizes = [1, 1055], strides = [1, 1]} : vector<1x1152xf32> to vector<1x1055xf32>
    %17 = vector.broadcast %15 : vector<8x1xf32> to vector<8x1055xf32>
    %18 = vector.broadcast %16 : vector<1x1055xf32> to vector<8x1055xf32>
    %19 = arith.mulf %17, %18 : vector<8x1055xf32>
    %20 = arith.addf %14, %19 : vector<8x1055xf32>
    %c0_7 = arith.constant 0 : index
    %c3 = arith.constant 3 : index
    %21 = vector.load %arg3[%c0_7, %c3] : memref<8x9xf32, #tpu.memory_space<vmem>>, vector<8x1xf32>
    %22 = vector.extract_strided_slice %3 {offsets = [0, 30], sizes = [1, 1055], strides = [1, 1]} : vector<1x1152xf32> to vector<1x1055xf32>
    %23 = vector.broadcast %21 : vector<8x1xf32> to vector<8x1055xf32>
    %24 = vector.broadcast %22 : vector<1x1055xf32> to vector<8x1055xf32>
    %25 = arith.mulf %23, %24 : vector<8x1055xf32>
    %26 = arith.addf %20, %25 : vector<8x1055xf32>
    %c0_8 = arith.constant 0 : index
    %c4 = arith.constant 4 : index
    %27 = vector.load %arg3[%c0_8, %c4] : memref<8x9xf32, #tpu.memory_space<vmem>>, vector<8x1xf32>
    %28 = vector.extract_strided_slice %3 {offsets = [0, 31], sizes = [1, 1055], strides = [1, 1]} : vector<1x1152xf32> to vector<1x1055xf32>
    %29 = vector.broadcast %27 : vector<8x1xf32> to vector<8x1055xf32>
    %30 = vector.broadcast %28 : vector<1x1055xf32> to vector<8x1055xf32>
    %31 = arith.mulf %29, %30 : vector<8x1055xf32>
    %32 = arith.addf %26, %31 : vector<8x1055xf32>
    %c0_9 = arith.constant 0 : index
    %c5 = arith.constant 5 : index
    %33 = vector.load %arg3[%c0_9, %c5] : memref<8x9xf32, #tpu.memory_space<vmem>>, vector<8x1xf32>
    %34 = vector.extract_strided_slice %3 {offsets = [0, 32], sizes = [1, 1055], strides = [1, 1]} : vector<1x1152xf32> to vector<1x1055xf32>
    %35 = vector.broadcast %33 : vector<8x1xf32> to vector<8x1055xf32>
    %36 = vector.broadcast %34 : vector<1x1055xf32> to vector<8x1055xf32>
    %37 = arith.mulf %35, %36 : vector<8x1055xf32>
    %38 = arith.addf %32, %37 : vector<8x1055xf32>
    %c0_10 = arith.constant 0 : index
    %c6 = arith.constant 6 : index
    %39 = vector.load %arg3[%c0_10, %c6] : memref<8x9xf32, #tpu.memory_space<vmem>>, vector<8x1xf32>
    %40 = vector.extract_strided_slice %3 {offsets = [0, 60], sizes = [1, 1055], strides = [1, 1]} : vector<1x1152xf32> to vector<1x1055xf32>
    %41 = vector.broadcast %39 : vector<8x1xf32> to vector<8x1055xf32>
    %42 = vector.broadcast %40 : vector<1x1055xf32> to vector<8x1055xf32>
    %43 = arith.mulf %41, %42 : vector<8x1055xf32>
    %44 = arith.addf %38, %43 : vector<8x1055xf32>
    %c0_11 = arith.constant 0 : index
    %c7 = arith.constant 7 : index
    %45 = vector.load %arg3[%c0_11, %c7] : memref<8x9xf32, #tpu.memory_space<vmem>>, vector<8x1xf32>
    %46 = vector.extract_strided_slice %3 {offsets = [0, 61], sizes = [1, 1055], strides = [1, 1]} : vector<1x1152xf32> to vector<1x1055xf32>
    %47 = vector.broadcast %45 : vector<8x1xf32> to vector<8x1055xf32>
    %48 = vector.broadcast %46 : vector<1x1055xf32> to vector<8x1055xf32>
    %49 = arith.mulf %47, %48 : vector<8x1055xf32>
    %50 = arith.addf %44, %49 : vector<8x1055xf32>
    %c0_12 = arith.constant 0 : index
    %c8 = arith.constant 8 : index
    %51 = vector.load %arg3[%c0_12, %c8] : memref<8x9xf32, #tpu.memory_space<vmem>>, vector<8x1xf32>
    %52 = vector.extract_strided_slice %3 {offsets = [0, 62], sizes = [1, 1055], strides = [1, 1]} : vector<1x1152xf32> to vector<1x1055xf32>
    %53 = vector.broadcast %51 : vector<8x1xf32> to vector<8x1055xf32>
    %54 = vector.broadcast %52 : vector<1x1055xf32> to vector<8x1055xf32>
    %55 = arith.mulf %53, %54 : vector<8x1055xf32>
    %56 = arith.addf %50, %55 : vector<8x1055xf32>
    %c0_13 = arith.constant 0 : index
    %c0_14 = arith.constant 0 : index
    %57 = vector.load %arg4[%c0_13, %c0_14] : memref<8x1xf32, #tpu.memory_space<vmem>>, vector<8x1xf32>
    %58 = vector.broadcast %57 : vector<8x1xf32> to vector<8x1055xf32>
    %59 = arith.addf %56, %58 : vector<8x1055xf32>
    %cst = arith.constant 0.000000e+00 : f32
    %60 = vector.broadcast %cst : f32 to vector<8x1055xf32>
    %61 = arith.maximumf %59, %60 : vector<8x1055xf32>
    %62 = vector.extract_strided_slice %61 {offsets = [0, 0], sizes = [8, 1024], strides = [1, 1]} : vector<8x1055xf32> to vector<8x1024xf32>
    %63 = vector.extract_strided_slice %61 {offsets = [0, 1], sizes = [8, 1024], strides = [1, 1]} : vector<8x1055xf32> to vector<8x1024xf32>
    %64 = arith.maximumf %62, %63 : vector<8x1024xf32>
    %65 = vector.extract_strided_slice %61 {offsets = [0, 30], sizes = [8, 1024], strides = [1, 1]} : vector<8x1055xf32> to vector<8x1024xf32>
    %66 = vector.extract_strided_slice %61 {offsets = [0, 31], sizes = [8, 1024], strides = [1, 1]} : vector<8x1055xf32> to vector<8x1024xf32>
    %67 = arith.maximumf %65, %66 : vector<8x1024xf32>
    %68 = arith.maximumf %64, %67 : vector<8x1024xf32>
    %69 = arith.truncf %68 : vector<8x1024xf32> to vector<8x1024xbf16>
    %c0_15 = arith.constant 0 : index
    %c0_16 = arith.constant 0 : index
    %70 = vector.load %arg5[%c0_15, %c0_16] : memref<8x1024xbf16, #tpu.memory_space<vmem>>, vector<8x1024xbf16>
    tpu.vector_store %arg5[%c0_15, %c0_16], %69 {strides = array<i32>} : memref<8x1024xbf16, #tpu.memory_space<vmem>>, vector<8x1024xbf16>,
    return
  }
  func.func @transform_0(%arg0: i32) -> (i32, i32) {
    %c0_i32 = arith.constant 0 : i32
    %c0_i32_0 = arith.constant 0 : i32
    return %c0_i32, %arg0 : i32, i32
  }
  func.func @transform_1(%arg0: i32) -> (i32, i32) {
    %c1_i32 = arith.constant 1 : i32
    %0 = arith.addi %arg0, %c1_i32 : i32
    %c8_i32 = arith.constant 8 : i32
    %1 = arith.muli %0, %c8_i32 : i32
    %c0_i32 = arith.constant 0 : i32
    %c0_i32_0 = arith.constant 0 : i32
    return %c0_i32, %1 : i32, i32
  }
  func.func @transform_2(%arg0: i32) -> (i32, i32) {
    %c0_i32 = arith.constant 0 : i32
    %c0_i32_0 = arith.constant 0 : i32
    %c0_i32_1 = arith.constant 0 : i32
    return %c0_i32, %c0_i32_0 : i32, i32
  }
  func.func @transform_3(%arg0: i32) -> (i32, i32) {
    %c0_i32 = arith.constant 0 : i32
    %c0_i32_0 = arith.constant 0 : i32
    %c0_i32_1 = arith.constant 0 : i32
    return %c0_i32, %c0_i32_0 : i32, i32
  }
  func.func @transform_4(%arg0: i32) -> (i32, i32) {
    %c0_i32 = arith.constant 0 : i32
    %c0_i32_0 = arith.constant 0 : i32
    return %c0_i32, %arg0 : i32, i32
  }
}

module attributes {stable_mosaic.version = 11 : i64} {
  func.func @_conv_relu_poolmax_kernel(%arg0: i32, %arg1: memref<8x256xbf16, #tpu.memory_space<vmem>>, %arg2: memref<8x128xbf16, #tpu.memory_space<vmem>>, %arg3: memref<9x16x8xbf16, #tpu.memory_space<vmem>>, %arg4: memref<16x1xf32, #tpu.memory_space<vmem>>, %arg5: memref<16x256xbf16, #tpu.memory_space<vmem>>) attributes {dimension_semantics = [#tpu.dimension_semantics<parallel>], iteration_bounds = array<i64: 2>, scalar_prefetch = 0 : i64, scratch_operands = 0 : i64, tpu.core_type = #tpu.core_type<tc>, window_params = [{transform_indices = @transform_0, window_bounds = array<i64: 8, 256>}, {transform_indices = @transform_1, window_bounds = array<i64: 8, 128>}, {pipeline_mode = #tpu.pipeline_mode<synchronous>, transform_indices = @transform_2, window_bounds = array<i64: 9, 16, 8>}, {pipeline_mode = #tpu.pipeline_mode<synchronous>, transform_indices = @transform_3, window_bounds = array<i64: 16, 1>}, {transform_indices = @transform_4, window_bounds = array<i64: 16, 256>}]} {
    %c0 = arith.constant 0 : index
    %c0_0 = arith.constant 0 : index
    %0 = vector.load %arg1[%c0, %c0_0] : memref<8x256xbf16, #tpu.memory_space<vmem>>, vector<8x256xbf16>
    %c0_1 = arith.constant 0 : index
    %c0_2 = arith.constant 0 : index
    %1 = vector.load %arg2[%c0_1, %c0_2] : memref<8x128xbf16, #tpu.memory_space<vmem>>, vector<8x128xbf16>
    %2 = tpu.concatenate %0, %1 in 1 : vector<8x256xbf16>, vector<8x128xbf16> -> vector<8x384xbf16>
    %c0_3 = arith.constant 0 : index
    %c0_4 = arith.constant 0 : index
    %c0_5 = arith.constant 0 : index
    %3 = vector.load %arg3[%c0_3, %c0_4, %c0_5] : memref<9x16x8xbf16, #tpu.memory_space<vmem>>, vector<1x16x8xbf16>
    %4 = vector.shape_cast %3 : vector<1x16x8xbf16> to vector<16x8xbf16>
    %5 = vector.extract_strided_slice %2 {offsets = [0, 0], sizes = [8, 273], strides = [1, 1]} : vector<8x384xbf16> to vector<8x273xbf16>
    %cst = arith.constant dense<0.000000e+00> : vector<16x273xf32>
    %6 = tpu.matmul %4, %5, %cst {dimension_numbers = #tpu.dot_dimension_numbers<[1], [0], [0], [1], [0, 0, 1, 1], [], []>} : vector<16x8xbf16>, vector<8x273xbf16>, vector<16x273xf32> -> vector<16x273xf32>
    %c1 = arith.constant 1 : index
    %c0_6 = arith.constant 0 : index
    %c0_7 = arith.constant 0 : index
    %7 = vector.load %arg3[%c1, %c0_6, %c0_7] : memref<9x16x8xbf16, #tpu.memory_space<vmem>>, vector<1x16x8xbf16>
    %8 = vector.shape_cast %7 : vector<1x16x8xbf16> to vector<16x8xbf16>
    %9 = vector.extract_strided_slice %2 {offsets = [0, 1], sizes = [8, 273], strides = [1, 1]} : vector<8x384xbf16> to vector<8x273xbf16>
    %cst_8 = arith.constant dense<0.000000e+00> : vector<16x273xf32>
    %10 = tpu.matmul %8, %9, %cst_8 {dimension_numbers = #tpu.dot_dimension_numbers<[1], [0], [0], [1], [0, 0, 1, 1], [], []>} : vector<16x8xbf16>, vector<8x273xbf16>, vector<16x273xf32> -> vector<16x273xf32>
    %11 = arith.addf %6, %10 : vector<16x273xf32>
    %c2 = arith.constant 2 : index
    %c0_9 = arith.constant 0 : index
    %c0_10 = arith.constant 0 : index
    %12 = vector.load %arg3[%c2, %c0_9, %c0_10] : memref<9x16x8xbf16, #tpu.memory_space<vmem>>, vector<1x16x8xbf16>
    %13 = vector.shape_cast %12 : vector<1x16x8xbf16> to vector<16x8xbf16>
    %14 = vector.extract_strided_slice %2 {offsets = [0, 2], sizes = [8, 273], strides = [1, 1]} : vector<8x384xbf16> to vector<8x273xbf16>
    %cst_11 = arith.constant dense<0.000000e+00> : vector<16x273xf32>
    %15 = tpu.matmul %13, %14, %cst_11 {dimension_numbers = #tpu.dot_dimension_numbers<[1], [0], [0], [1], [0, 0, 1, 1], [], []>} : vector<16x8xbf16>, vector<8x273xbf16>, vector<16x273xf32> -> vector<16x273xf32>
    %16 = arith.addf %11, %15 : vector<16x273xf32>
    %c3 = arith.constant 3 : index
    %c0_12 = arith.constant 0 : index
    %c0_13 = arith.constant 0 : index
    %17 = vector.load %arg3[%c3, %c0_12, %c0_13] : memref<9x16x8xbf16, #tpu.memory_space<vmem>>, vector<1x16x8xbf16>
    %18 = vector.shape_cast %17 : vector<1x16x8xbf16> to vector<16x8xbf16>
    %19 = vector.extract_strided_slice %2 {offsets = [0, 16], sizes = [8, 273], strides = [1, 1]} : vector<8x384xbf16> to vector<8x273xbf16>
    %cst_14 = arith.constant dense<0.000000e+00> : vector<16x273xf32>
    %20 = tpu.matmul %18, %19, %cst_14 {dimension_numbers = #tpu.dot_dimension_numbers<[1], [0], [0], [1], [0, 0, 1, 1], [], []>} : vector<16x8xbf16>, vector<8x273xbf16>, vector<16x273xf32> -> vector<16x273xf32>
    %21 = arith.addf %16, %20 : vector<16x273xf32>
    %c4 = arith.constant 4 : index
    %c0_15 = arith.constant 0 : index
    %c0_16 = arith.constant 0 : index
    %22 = vector.load %arg3[%c4, %c0_15, %c0_16] : memref<9x16x8xbf16, #tpu.memory_space<vmem>>, vector<1x16x8xbf16>
    %23 = vector.shape_cast %22 : vector<1x16x8xbf16> to vector<16x8xbf16>
    %24 = vector.extract_strided_slice %2 {offsets = [0, 17], sizes = [8, 273], strides = [1, 1]} : vector<8x384xbf16> to vector<8x273xbf16>
    %cst_17 = arith.constant dense<0.000000e+00> : vector<16x273xf32>
    %25 = tpu.matmul %23, %24, %cst_17 {dimension_numbers = #tpu.dot_dimension_numbers<[1], [0], [0], [1], [0, 0, 1, 1], [], []>} : vector<16x8xbf16>, vector<8x273xbf16>, vector<16x273xf32> -> vector<16x273xf32>
    %26 = arith.addf %21, %25 : vector<16x273xf32>
    %c5 = arith.constant 5 : index
    %c0_18 = arith.constant 0 : index
    %c0_19 = arith.constant 0 : index
    %27 = vector.load %arg3[%c5, %c0_18, %c0_19] : memref<9x16x8xbf16, #tpu.memory_space<vmem>>, vector<1x16x8xbf16>
    %28 = vector.shape_cast %27 : vector<1x16x8xbf16> to vector<16x8xbf16>
    %29 = vector.extract_strided_slice %2 {offsets = [0, 18], sizes = [8, 273], strides = [1, 1]} : vector<8x384xbf16> to vector<8x273xbf16>
    %cst_20 = arith.constant dense<0.000000e+00> : vector<16x273xf32>
    %30 = tpu.matmul %28, %29, %cst_20 {dimension_numbers = #tpu.dot_dimension_numbers<[1], [0], [0], [1], [0, 0, 1, 1], [], []>} : vector<16x8xbf16>, vector<8x273xbf16>, vector<16x273xf32> -> vector<16x273xf32>
    %31 = arith.addf %26, %30 : vector<16x273xf32>
    %c6 = arith.constant 6 : index
    %c0_21 = arith.constant 0 : index
    %c0_22 = arith.constant 0 : index
    %32 = vector.load %arg3[%c6, %c0_21, %c0_22] : memref<9x16x8xbf16, #tpu.memory_space<vmem>>, vector<1x16x8xbf16>
    %33 = vector.shape_cast %32 : vector<1x16x8xbf16> to vector<16x8xbf16>
    %34 = vector.extract_strided_slice %2 {offsets = [0, 32], sizes = [8, 273], strides = [1, 1]} : vector<8x384xbf16> to vector<8x273xbf16>
    %cst_23 = arith.constant dense<0.000000e+00> : vector<16x273xf32>
    %35 = tpu.matmul %33, %34, %cst_23 {dimension_numbers = #tpu.dot_dimension_numbers<[1], [0], [0], [1], [0, 0, 1, 1], [], []>} : vector<16x8xbf16>, vector<8x273xbf16>, vector<16x273xf32> -> vector<16x273xf32>
    %36 = arith.addf %31, %35 : vector<16x273xf32>
    %c7 = arith.constant 7 : index
    %c0_24 = arith.constant 0 : index
    %c0_25 = arith.constant 0 : index
    %37 = vector.load %arg3[%c7, %c0_24, %c0_25] : memref<9x16x8xbf16, #tpu.memory_space<vmem>>, vector<1x16x8xbf16>
    %38 = vector.shape_cast %37 : vector<1x16x8xbf16> to vector<16x8xbf16>
    %39 = vector.extract_strided_slice %2 {offsets = [0, 33], sizes = [8, 273], strides = [1, 1]} : vector<8x384xbf16> to vector<8x273xbf16>
    %cst_26 = arith.constant dense<0.000000e+00> : vector<16x273xf32>
    %40 = tpu.matmul %38, %39, %cst_26 {dimension_numbers = #tpu.dot_dimension_numbers<[1], [0], [0], [1], [0, 0, 1, 1], [], []>} : vector<16x8xbf16>, vector<8x273xbf16>, vector<16x273xf32> -> vector<16x273xf32>
    %41 = arith.addf %36, %40 : vector<16x273xf32>
    %c8 = arith.constant 8 : index
    %c0_27 = arith.constant 0 : index
    %c0_28 = arith.constant 0 : index
    %42 = vector.load %arg3[%c8, %c0_27, %c0_28] : memref<9x16x8xbf16, #tpu.memory_space<vmem>>, vector<1x16x8xbf16>
    %43 = vector.shape_cast %42 : vector<1x16x8xbf16> to vector<16x8xbf16>
    %44 = vector.extract_strided_slice %2 {offsets = [0, 34], sizes = [8, 273], strides = [1, 1]} : vector<8x384xbf16> to vector<8x273xbf16>
    %cst_29 = arith.constant dense<0.000000e+00> : vector<16x273xf32>
    %45 = tpu.matmul %43, %44, %cst_29 {dimension_numbers = #tpu.dot_dimension_numbers<[1], [0], [0], [1], [0, 0, 1, 1], [], []>} : vector<16x8xbf16>, vector<8x273xbf16>, vector<16x273xf32> -> vector<16x273xf32>
    %46 = arith.addf %41, %45 : vector<16x273xf32>
    %c0_30 = arith.constant 0 : index
    %c0_31 = arith.constant 0 : index
    %47 = vector.load %arg4[%c0_30, %c0_31] : memref<16x1xf32, #tpu.memory_space<vmem>>, vector<16x1xf32>
    %48 = vector.broadcast %47 : vector<16x1xf32> to vector<16x273xf32>
    %49 = arith.addf %46, %48 : vector<16x273xf32>
    %cst_32 = arith.constant 0.000000e+00 : f32
    %50 = vector.broadcast %cst_32 : f32 to vector<16x273xf32>
    %51 = arith.maximumf %49, %50 : vector<16x273xf32>
    %52 = vector.extract_strided_slice %51 {offsets = [0, 0], sizes = [16, 256], strides = [1, 1]} : vector<16x273xf32> to vector<16x256xf32>
    %53 = vector.extract_strided_slice %51 {offsets = [0, 1], sizes = [16, 256], strides = [1, 1]} : vector<16x273xf32> to vector<16x256xf32>
    %54 = arith.maximumf %52, %53 : vector<16x256xf32>
    %55 = vector.extract_strided_slice %51 {offsets = [0, 16], sizes = [16, 256], strides = [1, 1]} : vector<16x273xf32> to vector<16x256xf32>
    %56 = vector.extract_strided_slice %51 {offsets = [0, 17], sizes = [16, 256], strides = [1, 1]} : vector<16x273xf32> to vector<16x256xf32>
    %57 = arith.maximumf %55, %56 : vector<16x256xf32>
    %58 = arith.maximumf %54, %57 : vector<16x256xf32>
    %59 = arith.truncf %58 : vector<16x256xf32> to vector<16x256xbf16>
    %c0_33 = arith.constant 0 : index
    %c0_34 = arith.constant 0 : index
    %60 = vector.load %arg5[%c0_33, %c0_34] : memref<16x256xbf16, #tpu.memory_space<vmem>>, vector<16x256xbf16>
    tpu.vector_store %arg5[%c0_33, %c0_34], %59 {strides = array<i32>} : memref<16x256xbf16, #tpu.memory_space<vmem>>, vector<16x256xbf16>,
    return
  }
  func.func @transform_0(%arg0: i32) -> (i32, i32) {
    %c0_i32 = arith.constant 0 : i32
    %c0_i32_0 = arith.constant 0 : i32
    return %c0_i32, %arg0 : i32, i32
  }
  func.func @transform_1(%arg0: i32) -> (i32, i32) {
    %c1_i32 = arith.constant 1 : i32
    %0 = arith.addi %arg0, %c1_i32 : i32
    %c2_i32 = arith.constant 2 : i32
    %1 = arith.muli %0, %c2_i32 : i32
    %c0_i32 = arith.constant 0 : i32
    %c0_i32_0 = arith.constant 0 : i32
    return %c0_i32, %1 : i32, i32
  }
  func.func @transform_2(%arg0: i32) -> (i32, i32, i32) {
    %c0_i32 = arith.constant 0 : i32
    %c0_i32_0 = arith.constant 0 : i32
    %c0_i32_1 = arith.constant 0 : i32
    %c0_i32_2 = arith.constant 0 : i32
    return %c0_i32, %c0_i32_0, %c0_i32_1 : i32, i32, i32
  }
  func.func @transform_3(%arg0: i32) -> (i32, i32) {
    %c0_i32 = arith.constant 0 : i32
    %c0_i32_0 = arith.constant 0 : i32
    %c0_i32_1 = arith.constant 0 : i32
    return %c0_i32, %c0_i32_0 : i32, i32
  }
  func.func @transform_4(%arg0: i32) -> (i32, i32) {
    %c0_i32 = arith.constant 0 : i32
    %c0_i32_0 = arith.constant 0 : i32
    return %c0_i32, %arg0 : i32, i32
  }
}

module attributes {stable_mosaic.version = 11 : i64} {
  func.func @_linear_kernel(%arg0: i32, %arg1: memref<2x784xbf16, #tpu.memory_space<vmem>>, %arg2: memref<10x784xbf16, #tpu.memory_space<vmem>>, %arg3: memref<1x10xf32, #tpu.memory_space<vmem>>, %arg4: memref<2x10xf32, #tpu.memory_space<vmem>>) attributes {dimension_semantics = [#tpu.dimension_semantics<arbitrary>], iteration_bounds = array<i64: 1>, scalar_prefetch = 0 : i64, scratch_operands = 0 : i64, tpu.core_type = #tpu.core_type<tc>, window_params = [{pipeline_mode = #tpu.pipeline_mode<synchronous>, transform_indices = @transform_0, window_bounds = array<i64: 2, 784>}, {pipeline_mode = #tpu.pipeline_mode<synchronous>, transform_indices = @transform_1, window_bounds = array<i64: 10, 784>}, {pipeline_mode = #tpu.pipeline_mode<synchronous>, transform_indices = @transform_2, window_bounds = array<i64: 1, 10>}, {pipeline_mode = #tpu.pipeline_mode<synchronous>, transform_indices = @transform_3, window_bounds = array<i64: 2, 10>}]} {
    %c0 = arith.constant 0 : index
    %c0_0 = arith.constant 0 : index
    %0 = vector.load %arg1[%c0, %c0_0] : memref<2x784xbf16, #tpu.memory_space<vmem>>, vector<2x784xbf16>
    %c0_1 = arith.constant 0 : index
    %c0_2 = arith.constant 0 : index
    %1 = vector.load %arg2[%c0_1, %c0_2] : memref<10x784xbf16, #tpu.memory_space<vmem>>, vector<10x784xbf16>
    %cst = arith.constant dense<0.000000e+00> : vector<2x10xf32>
    %2 = tpu.matmul %0, %1, %cst {dimension_numbers = #tpu.dot_dimension_numbers<[1], [1], [0], [0], [0, 0, 1, 0], [], []>} : vector<2x784xbf16>, vector<10x784xbf16>, vector<2x10xf32> -> vector<2x10xf32>
    %c0_3 = arith.constant 0 : index
    %c0_4 = arith.constant 0 : index
    %3 = vector.load %arg3[%c0_3, %c0_4] : memref<1x10xf32, #tpu.memory_space<vmem>>, vector<1x10xf32>
    %4 = vector.broadcast %3 : vector<1x10xf32> to vector<2x10xf32>
    %5 = arith.addf %2, %4 : vector<2x10xf32>
    %c0_5 = arith.constant 0 : index
    %c0_6 = arith.constant 0 : index
    %6 = vector.load %arg4[%c0_5, %c0_6] : memref<2x10xf32, #tpu.memory_space<vmem>>, vector<2x10xf32>
    tpu.vector_store %arg4[%c0_5, %c0_6], %5 {strides = array<i32>} : memref<2x10xf32, #tpu.memory_space<vmem>>, vector<2x10xf32>,
    return
  }
  func.func @transform_0(%arg0: i32) -> (i32, i32) {
    %c0_i32 = arith.constant 0 : i32
    %c0_i32_0 = arith.constant 0 : i32
    %c0_i32_1 = arith.constant 0 : i32
    return %c0_i32, %c0_i32_0 : i32, i32
  }
  func.func @transform_1(%arg0: i32) -> (i32, i32) {
    %c0_i32 = arith.constant 0 : i32
    %c0_i32_0 = arith.constant 0 : i32
    %c0_i32_1 = arith.constant 0 : i32
    return %c0_i32, %c0_i32_0 : i32, i32
  }
  func.func @transform_2(%arg0: i32) -> (i32, i32) {
    %c0_i32 = arith.constant 0 : i32
    %c0_i32_0 = arith.constant 0 : i32
    %c0_i32_1 = arith.constant 0 : i32
    return %c0_i32, %c0_i32_0 : i32, i32
  }
  func.func @transform_3(%arg0: i32) -> (i32, i32) {
    %c0_i32 = arith.constant 0 : i32
    %c0_i32_0 = arith.constant 0 : i32
    %c0_i32_1 = arith.constant 0 : i32
    return %c0_i32, %c0_i32_0 : i32, i32
  }
}

</mosaic_0001>

<llo_original>
// kernel: cnn_forward.3
$region0: #{cnn_forward.3}
  #allocation0 [shape = 'u32[]', space=smem, size = 0x4, offset = 0x4, fixed_abs, tag = 'smem constant byte address 0x4 - core index']
  #allocation1 [shape = 'u32[144,128]{1,0:T(1,128)}', space=vmem, size = 0x12000, scoped, tag = 'internal scratch']
  %s0 = inlined_call_operand.vmem [shape: bf16[1,2176], index: 0, kind: input, shape index: {}, may-alias: {0,1}]
  %s1 = inlined_call_operand.vmem [shape: bf16[1,2176], index: 1, kind: input, shape index: {}, may-alias: {0,1}]
  %s2 = inlined_call_operand.vmem [shape: f32[8,9], index: 2, kind: input, shape index: {}]
  %s3 = inlined_call_operand.vmem [shape: f32[8,1], index: 3, kind: input, shape index: {}]
  %s4 = inlined_call_operand.vmem [shape: bf16[8,2048], index: 4, kind: output, shape index: {}]
  %s5 = sld [smem:[#allocation0]]
  $region49: #{cnn_forward.3} parent=0
    _
  %s7 = ssub.s32 1, %s5
  %s8 = scalar_select 0, %s7, %s5
  loop: start=0, step=1, limit=4
  $region2: #{cnn_forward.3} parent=0 // loop_pre_header
    _
  $region3: #{cnn_forward.3} parent=0 // loop_header
    %s10 = sphi 0, %s14
    %p11 = scmp.ge.s32.totalorder %s10, 4
    %s20 = sphi 0, %s22
    %s23 = sphi 0, %s20
    %s24 = sphi 0, %s23
    %s40 = sphi 0, %s24
    %s50 = sphi 0, %s52
    %s53 = sphi 0, %s50
    %s54 = sphi 0, %s53
    %s70 = sphi 0, %s54
    %s74 = sphi 0, %s74
    %s76 = sphi 0, %s74
    %s77 = sphi 0, %s76
    %s91 = sphi 0, %s77
    %s95 = sphi 0, %s95
    %s97 = sphi 0, %s95
    %s98 = sphi 0, %s97
    %s112 = sphi 0, %s98
    %s118 = sphi 0, %s120
    %s121 = sphi 0, %s118
    %s122 = sphi 0, %s121
    %s138 = sphi 0, %s122
  $region4: #{cnn_forward.3} parent=0 // loop_header_branch
    %13 = sbr.rel (%p11) target = $region8
  $region5: #{cnn_forward.3} parent=0 // loop_body
    %s15 = ssub.s32 %s10, 1
    %s16 = ssub.s32 %s10, 2
    %s17 = sadd.s32 %s10, 1
    %s18 = ssub.s32 %s10, %s17
    %p19 = scmp.eq.s32.totalorder %s18, 0
    %s21 = sadd.s32 %s20, 1
    %s22 = scalar_select %p19, %s20, %s21
    %p25 = pneg %p19
    %p26 = scmp.eq.s32.totalorder %s10, 1
    %p27 = por %p25, %p26
    %p28 = scmp.ne.s32.totalorder %s20, %s23
    %p29 = scmp.eq.s32.totalorder %s10, 0
    %p30 = por %p28, %p29
    %p31 = scmp.ne.s32.totalorder %s20, %s23
    %p32 = scmp.eq.s32.totalorder %s15, 1
    %p33 = por %p31, %p32
    %p34 = scmp.ne.s32.totalorder %s23, %s24
    %p35 = scmp.eq.s32.totalorder %s15, 0
    %p36 = por %p34, %p35
    %p37 = scmp.ne.s32.totalorder %s23, %s24
    %p38 = scmp.eq.s32.totalorder %s16, 1
    %p39 = por %p37, %p38
    %p41 = scmp.ne.s32.totalorder %s24, %s40
    %p42 = scmp.eq.s32.totalorder %s16, 0
    %p43 = por %p41, %p42
    %s44 = sadd.s32 %s10, 1
    %s45 = smul.u32 %s44, 8
    %s46 = sadd.s32 %s17, 1
    %s47 = smul.u32 %s46, 8
    %s48 = ssub.s32 %s45, %s47
    %p49 = scmp.eq.s32.totalorder %s48, 0
    %s51 = sadd.s32 %s50, 1
    %s52 = scalar_select %p49, %s50, %s51
    %p55 = pneg %p49
    %p56 = scmp.eq.s32.totalorder %s10, 1
    %p57 = por %p55, %p56
    %p58 = scmp.ne.s32.totalorder %s50, %s53
    %p59 = scmp.eq.s32.totalorder %s10, 0
    %p60 = por %p58, %p59
    %p61 = scmp.ne.s32.totalorder %s50, %s53
    %p62 = scmp.eq.s32.totalorder %s15, 1
    %p63 = por %p61, %p62
    %p64 = scmp.ne.s32.totalorder %s53, %s54
    %p65 = scmp.eq.s32.totalorder %s15, 0
    %p66 = por %p64, %p65
    %p67 = scmp.ne.s32.totalorder %s53, %s54
    %p68 = scmp.eq.s32.totalorder %s16, 1
    %p69 = por %p67, %p68
    %p71 = scmp.ne.s32.totalorder %s54, %s70
    %p72 = scmp.eq.s32.totalorder %s16, 0
    %p73 = por %p71, %p72
    %s75 = sadd.s32 %s74, 1
    %p78 = scmp.eq.s32.totalorder %s10, 1
    %p79 = scmp.ne.s32.totalorder %s74, %s76
    %p80 = scmp.eq.s32.totalorder %s10, 0
    %p81 = por %p79, %p80
    %p82 = scmp.ne.s32.totalorder %s74, %s76
    %p83 = scmp.eq.s32.totalorder %s15, 1
    %p84 = por %p82, %p83
    %p85 = scmp.ne.s32.totalorder %s76, %s77
    %p86 = scmp.eq.s32.totalorder %s15, 0
    %p87 = por %p85, %p86
    %p88 = scmp.ne.s32.totalorder %s76, %s77
    %p89 = scmp.eq.s32.totalorder %s16, 1
    %p90 = por %p88, %p89
    %p92 = scmp.ne.s32.totalorder %s77, %s91
    %p93 = scmp.eq.s32.totalorder %s16, 0
    %p94 = por %p92, %p93
    %s96 = sadd.s32 %s95, 1
    %p99 = scmp.eq.s32.totalorder %s10, 1
    %p100 = scmp.ne.s32.totalorder %s95, %s97
    %p101 = scmp.eq.s32.totalorder %s10, 0
    %p102 = por %p100, %p101
    %p103 = scmp.ne.s32.totalorder %s95, %s97
    %p104 = scmp.eq.s32.totalorder %s15, 1
    %p105 = por %p103, %p104
    %p106 = scmp.ne.s32.totalorder %s97, %s98
    %p107 = scmp.eq.s32.totalorder %s15, 0
    %p108 = por %p106, %p107
    %p109 = scmp.ne.s32.totalorder %s97, %s98
    %p110 = scmp.eq.s32.totalorder %s16, 1
    %p111 = por %p109, %p110
    %p113 = scmp.ne.s32.totalorder %s98, %s112
    %p114 = scmp.eq.s32.totalorder %s16, 0
    %p115 = por %p113, %p114
    %s116 = ssub.s32 %s10, %s17
    %p117 = scmp.eq.s32.totalorder %s116, 0
    %s119 = sadd.s32 %s118, 1
    %s120 = scalar_select %p117, %s118, %s119
    %p123 = pneg %p117
    %p124 = scmp.eq.s32.totalorder %s10, 1
    %p125 = por %p123, %p124
    %p126 = scmp.ne.s32.totalorder %s118, %s121
    %p127 = scmp.eq.s32.totalorder %s10, 0
    %p128 = por %p126, %p127
    %p129 = scmp.ne.s32.totalorder %s118, %s121
    %p130 = scmp.eq.s32.totalorder %s15, 1
    %p131 = por %p129, %p130
    %p132 = scmp.ne.s32.totalorder %s121, %s122
    %p133 = scmp.eq.s32.totalorder %s15, 0
    %p134 = por %p132, %p133
    %p135 = scmp.ne.s32.totalorder %s121, %s122
    %p136 = scmp.eq.s32.totalorder %s16, 1
    %p137 = por %p135, %p136
    %p139 = scmp.ne.s32.totalorder %s122, %s138
    %p140 = scmp.eq.s32.totalorder %s16, 0
    %p141 = por %p139, %p140
    %p142 = scmp.le.s32.totalorder 1, %s10
    %p143 = scmp.lt.s32.totalorder %s10, 3
    %p144 = pnand %p142, %p143
    %p145 = pneg %p144
    // Predicated region
    $region9: #{cnn_forward.3} parent=5 // pred_check
      _
    $region10: #{cnn_forward.3} parent=5 // pred_check_branch
      %147 = sbr.rel (%p144) target = $region12
    $region11: #{cnn_forward.3} parent=5 // pred_region
      %s148 = ssub.s32 %s10, 1
      // Predicated region
      $region13: #{cnn_forward.3} parent=11 // pred_check
        %p149 = pneg %p87
      $region14: #{cnn_forward.3} parent=11 // pred_check_branch
        %151 = sbr.rel (%p149) target = $region16
      $region15: #{cnn_forward.3} parent=11 // pred_region
        _
      $region16: #{cnn_forward.3} parent=11 // pred_fallthru
        _
      // Predicated region
      $region17: #{cnn_forward.3} parent=11 // pred_check
        %p152 = pneg %p108
      $region18: #{cnn_forward.3} parent=11 // pred_check_branch
        %154 = sbr.rel (%p152) target = $region20
      $region19: #{cnn_forward.3} parent=11 // pred_region
        _
      $region20: #{cnn_forward.3} parent=11 // pred_fallthru
        _
    $region12: #{cnn_forward.3} parent=5 // pred_fallthru
      _
    %p155 = scmp.lt.s32.totalorder %s10, 2
    // Predicated region
    $region21: #{cnn_forward.3} parent=5 // pred_check
      %p156 = pneg %p155
    $region22: #{cnn_forward.3} parent=5 // pred_check_branch
      %158 = sbr.rel (%p156) target = $region24
    $region23: #{cnn_forward.3} parent=5 // pred_region
      // Predicated region
      $region25: #{cnn_forward.3} parent=23 // pred_check
        %p159 = pneg %p30
      $region26: #{cnn_forward.3} parent=23 // pred_check_branch
        %161 = sbr.rel (%p159) target = $region28
      $region27: #{cnn_forward.3} parent=23 // pred_region
        %s162 = smul.u32 8, %s10
        %s163 = ssub.s32 17, %s162
        %p164 = scmp.lt.s32.totalorder %s163, 8
        %s165 = scalar_select %p164, %s163, 8
        %s166 = smul.u32 16, %s165
        %p167 = scmp.lt.s32.totalorder %s162, 16
        %s168 = scalar_select %p167, %s162, 16
        %s169 = scalar_lea.vmem %s0, %s168
        %s170 = smul.u32 8, %s10
        %s171 = ssub.s32 17, %s170
        %p172 = scmp.lt.s32.totalorder %s171, 8
        %s173 = scalar_select %p172, %s171, 8
        %s174 = smul.u32 16, %s173
      $region28: #{cnn_forward.3} parent=23 // pred_fallthru
        _
      // Predicated region
      $region29: #{cnn_forward.3} parent=23 // pred_check
        %p175 = pneg %p60
      $region30: #{cnn_forward.3} parent=23 // pred_check_branch
        %177 = sbr.rel (%p175) target = $region32
      $region31: #{cnn_forward.3} parent=23 // pred_region
        %s178 = sadd.s32 %s10, 1
        %s179 = smul.u32 %s178, 8
        %p180 = scmp.lt.s32.totalorder %s179, 16
        %s181 = scalar_select %p180, %s179, 16
        %s182 = scalar_lea.vmem %s1, %s181
        %s183 = sadd.s32 %s10, 1
        %s184 = smul.u32 %s183, 8
      $region32: #{cnn_forward.3} parent=23 // pred_fallthru
        _
    $region24: #{cnn_forward.3} parent=5 // pred_fallthru
      _
    %p185 = scmp.le.s32.totalorder 1, %s10
    %p186 = scmp.lt.s32.totalorder %s10, 3
    %p187 = pnand %p185, %p186
    %p188 = pneg %p187
    // Predicated region
    $region33: #{cnn_forward.3} parent=5 // pred_check
      _
    $region34: #{cnn_forward.3} parent=5 // pred_check_branch
      %190 = sbr.rel (%p187) target = $region36
    $region35: #{cnn_forward.3} parent=5 // pred_region
      %s191 = ssub.s32 %s10, 1
      %s192 = smul.u32 8, %s15
      %s193 = ssub.s32 17, %s192
      %p194 = scmp.lt.s32.totalorder %s193, 8
      %s195 = scalar_select %p194, %s193, 8
      %s196 = smul.u32 16, %s195
      %p197 = scmp.lt.s32.totalorder %s192, 16
      %s198 = scalar_select %p197, %s192, 16
      %s199 = scalar_lea.vmem %s0, %s198
      %p200 = pneg %p36
      %p201 = pneg %p33
      %s202 = sadd.s32 %s15, 1
      %s203 = smul.u32 %s202, 8
      %p204 = scmp.lt.s32.totalorder %s203, 16
      %s205 = scalar_select %p204, %s203, 16
      %s206 = scalar_lea.vmem %s1, %s205
      %p207 = pneg %p66
      %p208 = pneg %p63
      %p209 = pneg %p87
      %p210 = pneg %p84
      %p211 = pneg %p108
      %p212 = pneg %p105
      %p213 = pneg %p134
      %p214 = pneg %p131
      %s215 = smul.u32 8, %s15
      %p216 = scmp.lt.s32.totalorder %s215, 15
      %s217 = scalar_select %p216, %s215, 15
      %s218 = smul.addr %s217, 4
      %s219 = scalar_lea.vmem %s4, %s218
      %s220 = smul.u32 8, %s15
      %s221 = ssub.s32 17, %s220
      %p222 = scmp.lt.s32.totalorder %s221, 8
      %s223 = scalar_select %p222, %s221, 8
      %s224 = smul.u32 16, %s223
      %p225 = scmp.lt.s32.totalorder %s220, 16
      %s226 = scalar_select %p225, %s220, 16
      %s227 = scalar_lea.vmem %s0, %s226
      %s228 = smul.u32 8, %s15
      %s229 = ssub.s32 17, %s228
      %p230 = scmp.lt.s32.totalorder %s229, 8
      %s231 = scalar_select %p230, %s229, 8
      %s232 = smul.u32 16, %s231
      %s233 = sadd.s32 %s15, 1
      %s234 = smul.u32 %s233, 8
      %p235 = scmp.lt.s32.totalorder %s234, 16
      %s236 = scalar_select %p235, %s234, 16
      %s237 = scalar_lea.vmem %s1, %s236
      %s238 = sadd.s32 %s15, 1
      %s239 = smul.u32 %s238, 8
      %s240 = smul.u32 8, %s15
      %p241 = scmp.lt.s32.totalorder %s240, 15
      %s242 = scalar_select %p241, %s240, 15
      %s243 = smul.addr %s242, 4
      %s244 = scalar_lea.vmem %s4, %s243
      %s245 = smul.u32 8, %s15
      %v246 = vld [vmem:[%s227] sm:$0xff]
      %v247 = vld [vmem:[%s237] sm:$0x1]
      %v249 = vcombine.high %v246, %v246
      %v251 = vunpack.c.l.s4 1966171168
      %v252 = vunpack.c.0.s8 %v251
      %v253 = vlaneseq
      %v254 = vshrl.u32 %v253, 7
      %v255 = vsub.s32 %v252, %v254
      %v256 = vrot.slane %v246, %v255
      %v258 = vunpack.c.l.s4 1966171168
      %v259 = vunpack.c.0.s8 %v258
      %v260 = vlaneseq
      %v261 = vshrl.u32 %v260, 7
      %v262 = vsub.s32 %v259, %v261
      %v263 = vrot.slane %v249, %v262
      %v264 = vcombine.high %v256, %v256
      %v265 = vcombine.high %v263, %v263
      %v267 = vunpack.c.l.s4 1966171168
      %v268 = vunpack.c.0.s8 %v267
      %v269 = vlaneseq
      %v270 = vshrl.u32 %v269, 7
      %v271 = vsub.s32 %v268, %v270
      %v272 = vrot.slane %v256, %v271
      %v274 = vunpack.c.l.s4 1966171168
      %v275 = vunpack.c.0.s8 %v274
      %v276 = vlaneseq
      %v277 = vshrl.u32 %v276, 7
      %v278 = vsub.s32 %v275, %v277
      %v279 = vrot.slane %v263, %v278
      %v281 = vunpack.c.l.s4 1966171168
      %v282 = vunpack.c.0.s8 %v281
      %v283 = vlaneseq
      %v284 = vshrl.u32 %v283, 7
      %v285 = vsub.s32 %v282, %v284
      %v286 = vrot.slane %v264, %v285
      %v288 = vunpack.c.l.s4 1966171168
      %v289 = vunpack.c.0.s8 %v288
      %v290 = vlaneseq
      %v291 = vshrl.u32 %v290, 7
      %v292 = vsub.s32 %v289, %v291
      %v293 = vrot.slane %v265, %v292
      %v294 = vcombine.high %v272, %v272
      %v295 = vcombine.high %v279, %v279
      %v296 = vcombine.high %v286, %v286
      %v297 = vcombine.high %v293, %v293
      %v306 = vunpack.c.l.bf16 %v272
      %v307 = vunpack.c.l.bf16 %v286
      %v308 = vunpack.c.l.bf16 %v294
      %v309 = vunpack.c.l.bf16 %v296
      %v310 = vunpack.c.l.bf16 %v279
      %v311 = vunpack.c.l.bf16 %v293
      %v312 = vunpack.c.l.bf16 %v295
      %v313 = vunpack.c.l.bf16 %v297
      %v314 = vunpack.c.l.bf16 %v247
      %v315 = vld [vmem:[%s2] sm:$0xff]
      %317 = vset.pattern.permute.xlu0 0
      %318 = vperm.xlu0 %317, %v315
      %v319 = vpop.permute.xlu0 %318
      %v321 = vlaneseq
      %v322 = vshrl.u32 %v321, 7
      %v323 = vsub.s32 0, %v322
      %v324 = vrot.slane %v306, %v323
      %v325 = vlaneseq
      %v326 = vshrl.u32 %v325, 7
      %v327 = vsub.s32 0, %v326
      %v328 = vrot.slane %v307, %v327
      %v329 = vlaneseq
      %v330 = vshrl.u32 %v329, 7
      %v331 = vsub.s32 0, %v330
      %v332 = vrot.slane %v308, %v331
      %v333 = vlaneseq
      %v334 = vshrl.u32 %v333, 7
      %v335 = vsub.s32 0, %v334
      %v336 = vrot.slane %v309, %v335
      %v337 = vlaneseq
      %v338 = vshrl.u32 %v337, 7
      %v339 = vsub.s32 0, %v338
      %v340 = vrot.slane %v310, %v339
      %v341 = vlaneseq
      %v342 = vshrl.u32 %v341, 7
      %v343 = vsub.s32 0, %v342
      %v344 = vrot.slane %v311, %v343
      %v345 = vlaneseq
      %v346 = vshrl.u32 %v345, 7
      %v347 = vsub.s32 0, %v346
      %v348 = vrot.slane %v312, %v347
      %v349 = vlaneseq
      %v350 = vshrl.u32 %v349, 7
      %v351 = vsub.s32 0, %v350
      %v352 = vrot.slane %v313, %v351
      %v353 = vlaneseq
      %v354 = vshrl.u32 %v353, 7
      %v355 = vsub.s32 0, %v354
      %v356 = vrot.slane %v314, %v355
      %v357 = vmul.f32 %v319, %v324
      %v358 = vmul.f32 %v319, %v328
      %v359 = vmul.f32 %v319, %v332
      %v360 = vmul.f32 %v319, %v336
      %v361 = vmul.f32 %v319, %v340
      %v362 = vmul.f32 %v319, %v344
      %v363 = vmul.f32 %v319, %v348
      %v364 = vmul.f32 %v319, %v352
      %v365 = vmul.f32 %v319, %v356
      %366 = vset.pattern.permute.xlu0 1
      %367 = vperm.xlu0 %366, %v315
      %v368 = vpop.permute.xlu0 %367
      %v370 = vmul.f32 %v368, %v324
      %v371 = vmul.f32 %v368, %v328
      %v372 = vmul.f32 %v368, %v332
      %v373 = vmul.f32 %v368, %v336
      %v374 = vmul.f32 %v368, %v340
      %v375 = vmul.f32 %v368, %v344
      %v376 = vmul.f32 %v368, %v348
      %v377 = vmul.f32 %v368, %v352
      %v378 = vmul.f32 %v368, %v356
      %388 = vrot.lane.b32.xlu0 %v370, 127
      %v389 = vpop.permute.xlu0 %388
      %390 = vrot.lane.b32.xlu0 %v371, 127
      %v391 = vpop.permute.xlu0 %390
      %392 = vrot.lane.b32.xlu0 %v372, 127
      %v393 = vpop.permute.xlu0 %392
      %394 = vrot.lane.b32.xlu0 %v373, 127
      %v395 = vpop.permute.xlu0 %394
      %396 = vrot.lane.b32.xlu0 %v374, 127
      %v397 = vpop.permute.xlu0 %396
      %398 = vrot.lane.b32.xlu0 %v375, 127
      %v399 = vpop.permute.xlu0 %398
      %400 = vrot.lane.b32.xlu0 %v376, 127
      %v401 = vpop.permute.xlu0 %400
      %402 = vrot.lane.b32.xlu0 %v377, 127
      %v403 = vpop.permute.xlu0 %402
      %404 = vrot.lane.b32.xlu0 %v378, 127
      %v405 = vpop.permute.xlu0 %404
      %vm406 = vcmask 1039360
      %v407 = vsel %vm406, %v389, %v391
      %v408 = vsel %vm406, %v391, %v393
      %v409 = vsel %vm406, %v393, %v395
      %v410 = vsel %vm406, %v395, %v397
      %v411 = vsel %vm406, %v397, %v399
      %v412 = vsel %vm406, %v399, %v401
      %v413 = vsel %vm406, %v401, %v403
      %v414 = vsel %vm406, %v403, %v405
      %v424 = vadd.f32 %v357, %v407
      %v425 = vadd.f32 %v358, %v408
      %v426 = vadd.f32 %v359, %v409
      %v427 = vadd.f32 %v360, %v410
      %v428 = vadd.f32 %v361, %v411
      %v429 = vadd.f32 %v362, %v412
      %v430 = vadd.f32 %v363, %v413
      %v431 = vadd.f32 %v364, %v414
      %v432 = vadd.f32 %v365, %v405
      %433 = vset.pattern.permute.xlu0 2
      %434 = vperm.xlu0 %433, %v315
      %v435 = vpop.permute.xlu0 %434
      %v437 = vmul.f32 %v435, %v324
      %v438 = vmul.f32 %v435, %v328
      %v439 = vmul.f32 %v435, %v332
      %v440 = vmul.f32 %v435, %v336
      %v441 = vmul.f32 %v435, %v340
      %v442 = vmul.f32 %v435, %v344
      %v443 = vmul.f32 %v435, %v348
      %v444 = vmul.f32 %v435, %v352
      %v445 = vmul.f32 %v435, %v356
      %455 = vrot.lane.b32.xlu0 %v437, 126
      %v456 = vpop.permute.xlu0 %455
      %457 = vrot.lane.b32.xlu0 %v438, 126
      %v458 = vpop.permute.xlu0 %457
      %459 = vrot.lane.b32.xlu0 %v439, 126
      %v460 = vpop.permute.xlu0 %459
      %461 = vrot.lane.b32.xlu0 %v440, 126
      %v462 = vpop.permute.xlu0 %461
      %463 = vrot.lane.b32.xlu0 %v441, 126
      %v464 = vpop.permute.xlu0 %463
      %465 = vrot.lane.b32.xlu0 %v442, 126
      %v466 = vpop.permute.xlu0 %465
      %467 = vrot.lane.b32.xlu0 %v443, 126
      %v468 = vpop.permute.xlu0 %467
      %469 = vrot.lane.b32.xlu0 %v444, 126
      %v470 = vpop.permute.xlu0 %469
      %471 = vrot.lane.b32.xlu0 %v445, 126
      %v472 = vpop.permute.xlu0 %471
      %vm473 = vcmask 1031168
      %v474 = vsel %vm473, %v456, %v458
      %v475 = vsel %vm473, %v458, %v460
      %v476 = vsel %vm473, %v460, %v462
      %v477 = vsel %vm473, %v462, %v464
      %v478 = vsel %vm473, %v464, %v466
      %v479 = vsel %vm473, %v466, %v468
      %v480 = vsel %vm473, %v468, %v470
      %v481 = vsel %vm473, %v470, %v472
      %v491 = vadd.f32 %v424, %v474
      %v492 = vadd.f32 %v425, %v475
      %v493 = vadd.f32 %v426, %v476
      %v494 = vadd.f32 %v427, %v477
      %v495 = vadd.f32 %v428, %v478
      %v496 = vadd.f32 %v429, %v479
      %v497 = vadd.f32 %v430, %v480
      %v498 = vadd.f32 %v431, %v481
      %v499 = vadd.f32 %v432, %v472
      %500 = vset.pattern.permute.xlu0 3
      %501 = vperm.xlu0 %500, %v315
      %v502 = vpop.permute.xlu0 %501
      %v504 = vmul.f32 %v502, %v324
      %v505 = vmul.f32 %v502, %v328
      %v506 = vmul.f32 %v502, %v332
      %v507 = vmul.f32 %v502, %v336
      %v508 = vmul.f32 %v502, %v340
      %v509 = vmul.f32 %v502, %v344
      %v510 = vmul.f32 %v502, %v348
      %v511 = vmul.f32 %v502, %v352
      %v512 = vmul.f32 %v502, %v356
      %522 = vrot.lane.b32.xlu0 %v504, 98
      %v523 = vpop.permute.xlu0 %522
      %524 = vrot.lane.b32.xlu0 %v505, 98
      %v525 = vpop.permute.xlu0 %524
      %526 = vrot.lane.b32.xlu0 %v506, 98
      %v527 = vpop.permute.xlu0 %526
      %528 = vrot.lane.b32.xlu0 %v507, 98
      %v529 = vpop.permute.xlu0 %528
      %530 = vrot.lane.b32.xlu0 %v508, 98
      %v531 = vpop.permute.xlu0 %530
      %532 = vrot.lane.b32.xlu0 %v509, 98
      %v533 = vpop.permute.xlu0 %532
      %534 = vrot.lane.b32.xlu0 %v510, 98
      %v535 = vpop.permute.xlu0 %534
      %536 = vrot.lane.b32.xlu0 %v511, 98
      %v537 = vpop.permute.xlu0 %536
      %538 = vrot.lane.b32.xlu0 %v512, 98
      %v539 = vpop.permute.xlu0 %538
      %vm540 = vcmask 801792
      %v541 = vsel %vm540, %v523, %v525
      %v542 = vsel %vm540, %v525, %v527
      %v543 = vsel %vm540, %v527, %v529
      %v544 = vsel %vm540, %v529, %v531
      %v545 = vsel %vm540, %v531, %v533
      %v546 = vsel %vm540, %v533, %v535
      %v547 = vsel %vm540, %v535, %v537
      %v548 = vsel %vm540, %v537, %v539
      %v558 = vadd.f32 %v491, %v541
      %v559 = vadd.f32 %v492, %v542
      %v560 = vadd.f32 %v493, %v543
      %v561 = vadd.f32 %v494, %v544
      %v562 = vadd.f32 %v495, %v545
      %v563 = vadd.f32 %v496, %v546
      %v564 = vadd.f32 %v497, %v547
      %v565 = vadd.f32 %v498, %v548
      %v566 = vadd.f32 %v499, %v539
      %567 = vset.pattern.permute.xlu0 4
      %568 = vperm.xlu0 %567, %v315
      %v569 = vpop.permute.xlu0 %568
      %v571 = vmul.f32 %v569, %v324
      %v572 = vmul.f32 %v569, %v328
      %v573 = vmul.f32 %v569, %v332
      %v574 = vmul.f32 %v569, %v336
      %v575 = vmul.f32 %v569, %v340
      %v576 = vmul.f32 %v569, %v344
      %v577 = vmul.f32 %v569, %v348
      %v578 = vmul.f32 %v569, %v352
      %v579 = vmul.f32 %v569, %v356
      %589 = vrot.lane.b32.xlu0 %v571, 97
      %v590 = vpop.permute.xlu0 %589
      %591 = vrot.lane.b32.xlu0 %v572, 97
      %v592 = vpop.permute.xlu0 %591
      %593 = vrot.lane.b32.xlu0 %v573, 97
      %v594 = vpop.permute.xlu0 %593
      %595 = vrot.lane.b32.xlu0 %v574, 97
      %v596 = vpop.permute.xlu0 %595
      %597 = vrot.lane.b32.xlu0 %v575, 97
      %v598 = vpop.permute.xlu0 %597
      %599 = vrot.lane.b32.xlu0 %v576, 97
      %v600 = vpop.permute.xlu0 %599
      %601 = vrot.lane.b32.xlu0 %v577, 97
      %v602 = vpop.permute.xlu0 %601
      %603 = vrot.lane.b32.xlu0 %v578, 97
      %v604 = vpop.permute.xlu0 %603
      %605 = vrot.lane.b32.xlu0 %v579, 97
      %v606 = vpop.permute.xlu0 %605
      %vm607 = vcmask 793600
      %v608 = vsel %vm607, %v590, %v592
      %v609 = vsel %vm607, %v592, %v594
      %v610 = vsel %vm607, %v594, %v596
      %v611 = vsel %vm607, %v596, %v598
      %v612 = vsel %vm607, %v598, %v600
      %v613 = vsel %vm607, %v600, %v602
      %v614 = vsel %vm607, %v602, %v604
      %v615 = vsel %vm607, %v604, %v606
      %v625 = vadd.f32 %v558, %v608
      %v626 = vadd.f32 %v559, %v609
      %v627 = vadd.f32 %v560, %v610
      %v628 = vadd.f32 %v561, %v611
      %v629 = vadd.f32 %v562, %v612
      %v630 = vadd.f32 %v563, %v613
      %v631 = vadd.f32 %v564, %v614
      %v632 = vadd.f32 %v565, %v615
      %v633 = vadd.f32 %v566, %v606
      %634 = vset.pattern.permute.xlu0 5
      %635 = vperm.xlu0 %634, %v315
      %v636 = vpop.permute.xlu0 %635
      %v638 = vmul.f32 %v636, %v324
      %v639 = vmul.f32 %v636, %v328
      %v640 = vmul.f32 %v636, %v332
      %v641 = vmul.f32 %v636, %v336
      %v642 = vmul.f32 %v636, %v340
      %v643 = vmul.f32 %v636, %v344
      %v644 = vmul.f32 %v636, %v348
      %v645 = vmul.f32 %v636, %v352
      %v646 = vmul.f32 %v636, %v356
      %656 = vrot.lane.b32.xlu0 %v638, 96
      %v657 = vpop.permute.xlu0 %656
      %658 = vrot.lane.b32.xlu0 %v639, 96
      %v659 = vpop.permute.xlu0 %658
      %660 = vrot.lane.b32.xlu0 %v640, 96
      %v661 = vpop.permute.xlu0 %660
      %662 = vrot.lane.b32.xlu0 %v641, 96
      %v663 = vpop.permute.xlu0 %662
      %664 = vrot.lane.b32.xlu0 %v642, 96
      %v665 = vpop.permute.xlu0 %664
      %666 = vrot.lane.b32.xlu0 %v643, 96
      %v667 = vpop.permute.xlu0 %666
      %668 = vrot.lane.b32.xlu0 %v644, 96
      %v669 = vpop.permute.xlu0 %668
      %670 = vrot.lane.b32.xlu0 %v645, 96
      %v671 = vpop.permute.xlu0 %670
      %672 = vrot.lane.b32.xlu0 %v646, 96
      %v673 = vpop.permute.xlu0 %672
      %vm674 = vcmask 785408
      %v675 = vsel %vm674, %v657, %v659
      %v676 = vsel %vm674, %v659, %v661
      %v677 = vsel %vm674, %v661, %v663
      %v678 = vsel %vm674, %v663, %v665
      %v679 = vsel %vm674, %v665, %v667
      %v680 = vsel %vm674, %v667, %v669
      %v681 = vsel %vm674, %v669, %v671
      %v682 = vsel %vm674, %v671, %v673
      %v692 = vadd.f32 %v625, %v675
      %v693 = vadd.f32 %v626, %v676
      %v694 = vadd.f32 %v627, %v677
      %v695 = vadd.f32 %v628, %v678
      %v696 = vadd.f32 %v629, %v679
      %v697 = vadd.f32 %v630, %v680
      %v698 = vadd.f32 %v631, %v681
      %v699 = vadd.f32 %v632, %v682
      %v700 = vadd.f32 %v633, %v673
      %701 = vset.pattern.permute.xlu0 6
      %702 = vperm.xlu0 %701, %v315
      %v703 = vpop.permute.xlu0 %702
      %v705 = vmul.f32 %v703, %v324
      %v706 = vmul.f32 %v703, %v328
      %v707 = vmul.f32 %v703, %v332
      %v708 = vmul.f32 %v703, %v336
      %v709 = vmul.f32 %v703, %v340
      %v710 = vmul.f32 %v703, %v344
      %v711 = vmul.f32 %v703, %v348
      %v712 = vmul.f32 %v703, %v352
      %v713 = vmul.f32 %v703, %v356
      %723 = vrot.lane.b32.xlu0 %v705, 68
      %v724 = vpop.permute.xlu0 %723
      %725 = vrot.lane.b32.xlu0 %v706, 68
      %v726 = vpop.permute.xlu0 %725
      %727 = vrot.lane.b32.xlu0 %v707, 68
      %v728 = vpop.permute.xlu0 %727
      %729 = vrot.lane.b32.xlu0 %v708, 68
      %v730 = vpop.permute.xlu0 %729
      %731 = vrot.lane.b32.xlu0 %v709, 68
      %v732 = vpop.permute.xlu0 %731
      %733 = vrot.lane.b32.xlu0 %v710, 68
      %v734 = vpop.permute.xlu0 %733
      %735 = vrot.lane.b32.xlu0 %v711, 68
      %v736 = vpop.permute.xlu0 %735
      %737 = vrot.lane.b32.xlu0 %v712, 68
      %v738 = vpop.permute.xlu0 %737
      %739 = vrot.lane.b32.xlu0 %v713, 68
      %v740 = vpop.permute.xlu0 %739
      %vm741 = vcmask 556032
      %v742 = vsel %vm741, %v724, %v726
      %v743 = vsel %vm741, %v726, %v728
      %v744 = vsel %vm741, %v728, %v730
      %v745 = vsel %vm741, %v730, %v732
      %v746 = vsel %vm741, %v732, %v734
      %v747 = vsel %vm741, %v734, %v736
      %v748 = vsel %vm741, %v736, %v738
      %v749 = vsel %vm741, %v738, %v740
      %v759 = vadd.f32 %v692, %v742
      %v760 = vadd.f32 %v693, %v743
      %v761 = vadd.f32 %v694, %v744
      %v762 = vadd.f32 %v695, %v745
      %v763 = vadd.f32 %v696, %v746
      %v764 = vadd.f32 %v697, %v747
      %v765 = vadd.f32 %v698, %v748
      %v766 = vadd.f32 %v699, %v749
      %v767 = vadd.f32 %v700, %v740
      %768 = vset.pattern.permute.xlu0 7
      %769 = vperm.xlu0 %768, %v315
      %v770 = vpop.permute.xlu0 %769
      %v772 = vmul.f32 %v770, %v324
      %v773 = vmul.f32 %v770, %v328
      %v774 = vmul.f32 %v770, %v332
      %v775 = vmul.f32 %v770, %v336
      %v776 = vmul.f32 %v770, %v340
      %v777 = vmul.f32 %v770, %v344
      %v778 = vmul.f32 %v770, %v348
      %v779 = vmul.f32 %v770, %v352
      %v780 = vmul.f32 %v770, %v356
      %790 = vrot.lane.b32.xlu0 %v772, 67
      %v791 = vpop.permute.xlu0 %790
      %792 = vrot.lane.b32.xlu0 %v773, 67
      %v793 = vpop.permute.xlu0 %792
      %794 = vrot.lane.b32.xlu0 %v774, 67
      %v795 = vpop.permute.xlu0 %794
      %796 = vrot.lane.b32.xlu0 %v775, 67
      %v797 = vpop.permute.xlu0 %796
      %798 = vrot.lane.b32.xlu0 %v776, 67
      %v799 = vpop.permute.xlu0 %798
      %800 = vrot.lane.b32.xlu0 %v777, 67
      %v801 = vpop.permute.xlu0 %800
      %802 = vrot.lane.b32.xlu0 %v778, 67
      %v803 = vpop.permute.xlu0 %802
      %804 = vrot.lane.b32.xlu0 %v779, 67
      %v805 = vpop.permute.xlu0 %804
      %806 = vrot.lane.b32.xlu0 %v780, 67
      %v807 = vpop.permute.xlu0 %806
      %vm808 = vcmask 547840
      %v809 = vsel %vm808, %v791, %v793
      %v810 = vsel %vm808, %v793, %v795
      %v811 = vsel %vm808, %v795, %v797
      %v812 = vsel %vm808, %v797, %v799
      %v813 = vsel %vm808, %v799, %v801
      %v814 = vsel %vm808, %v801, %v803
      %v815 = vsel %vm808, %v803, %v805
      %v816 = vsel %vm808, %v805, %v807
      %v826 = vadd.f32 %v759, %v809
      %v827 = vadd.f32 %v760, %v810
      %v828 = vadd.f32 %v761, %v811
      %v829 = vadd.f32 %v762, %v812
      %v830 = vadd.f32 %v763, %v813
      %v831 = vadd.f32 %v764, %v814
      %v832 = vadd.f32 %v765, %v815
      %v833 = vadd.f32 %v766, %v816
      %v834 = vadd.f32 %v767, %v807
      %835 = vset.pattern.permute.xlu0 8
      %836 = vperm.xlu0 %835, %v315
      %v837 = vpop.permute.xlu0 %836
      %v839 = vmul.f32 %v837, %v324
      %v840 = vmul.f32 %v837, %v328
      %v841 = vmul.f32 %v837, %v332
      %v842 = vmul.f32 %v837, %v336
      %v843 = vmul.f32 %v837, %v340
      %v844 = vmul.f32 %v837, %v344
      %v845 = vmul.f32 %v837, %v348
      %v846 = vmul.f32 %v837, %v352
      %v847 = vmul.f32 %v837, %v356
      %857 = vrot.lane.b32.xlu0 %v839, 66
      %v858 = vpop.permute.xlu0 %857
      %859 = vrot.lane.b32.xlu0 %v840, 66
      %v860 = vpop.permute.xlu0 %859
      %861 = vrot.lane.b32.xlu0 %v841, 66
      %v862 = vpop.permute.xlu0 %861
      %863 = vrot.lane.b32.xlu0 %v842, 66
      %v864 = vpop.permute.xlu0 %863
      %865 = vrot.lane.b32.xlu0 %v843, 66
      %v866 = vpop.permute.xlu0 %865
      %867 = vrot.lane.b32.xlu0 %v844, 66
      %v868 = vpop.permute.xlu0 %867
      %869 = vrot.lane.b32.xlu0 %v845, 66
      %v870 = vpop.permute.xlu0 %869
      %871 = vrot.lane.b32.xlu0 %v846, 66
      %v872 = vpop.permute.xlu0 %871
      %873 = vrot.lane.b32.xlu0 %v847, 66
      %v874 = vpop.permute.xlu0 %873
      %vm875 = vcmask 539648
      %v876 = vsel %vm875, %v858, %v860
      %v877 = vsel %vm875, %v860, %v862
      %v878 = vsel %vm875, %v862, %v864
      %v879 = vsel %vm875, %v864, %v866
      %v880 = vsel %vm875, %v866, %v868
      %v881 = vsel %vm875, %v868, %v870
      %v882 = vsel %vm875, %v870, %v872
      %v883 = vsel %vm875, %v872, %v874
      %v893 = vadd.f32 %v826, %v876
      %v894 = vadd.f32 %v827, %v877
      %v895 = vadd.f32 %v828, %v878
      %v896 = vadd.f32 %v829, %v879
      %v897 = vadd.f32 %v830, %v880
      %v898 = vadd.f32 %v831, %v881
      %v899 = vadd.f32 %v832, %v882
      %v900 = vadd.f32 %v833, %v883
      %v901 = vadd.f32 %v834, %v874
      %v902 = vld [vmem:[%s3] sm:$0xff]
      %904 = vset.pattern.permute.xlu0 0
      %905 = vperm.xlu0 %904, %v902
      %v906 = vpop.permute.xlu0 %905
      %v908 = vadd.f32 %v893, %v906
      %v909 = vadd.f32 %v894, %v906
      %v910 = vadd.f32 %v895, %v906
      %v911 = vadd.f32 %v896, %v906
      %v912 = vadd.f32 %v897, %v906
      %v913 = vadd.f32 %v898, %v906
      %v914 = vadd.f32 %v899, %v906
      %v915 = vadd.f32 %v900, %v906
      %v916 = vadd.f32 %v901, %v906
      %v917 = vmax.f32 %v908, 0.0
      %v918 = vmax.f32 %v909, 0.0
      %v919 = vmax.f32 %v910, 0.0
      %v920 = vmax.f32 %v911, 0.0
      %v921 = vmax.f32 %v912, 0.0
      %v922 = vmax.f32 %v913, 0.0
      %v923 = vmax.f32 %v914, 0.0
      %v924 = vmax.f32 %v915, 0.0
      %v925 = vmax.f32 %v916, 0.0
      %935 = vrot.lane.b32.xlu0 %v917, 127
      %v936 = vpop.permute.xlu0 %935
      %937 = vrot.lane.b32.xlu0 %v918, 127
      %v938 = vpop.permute.xlu0 %937
      %939 = vrot.lane.b32.xlu0 %v919, 127
      %v940 = vpop.permute.xlu0 %939
      %941 = vrot.lane.b32.xlu0 %v920, 127
      %v942 = vpop.permute.xlu0 %941
      %943 = vrot.lane.b32.xlu0 %v921, 127
      %v944 = vpop.permute.xlu0 %943
      %945 = vrot.lane.b32.xlu0 %v922, 127
      %v946 = vpop.permute.xlu0 %945
      %947 = vrot.lane.b32.xlu0 %v923, 127
      %v948 = vpop.permute.xlu0 %947
      %949 = vrot.lane.b32.xlu0 %v924, 127
      %v950 = vpop.permute.xlu0 %949
      %951 = vrot.lane.b32.xlu0 %v925, 127
      %v952 = vpop.permute.xlu0 %951
      %v953 = vsel %vm406, %v936, %v938
      %v954 = vsel %vm406, %v938, %v940
      %v955 = vsel %vm406, %v940, %v942
      %v956 = vsel %vm406, %v942, %v944
      %v957 = vsel %vm406, %v944, %v946
      %v958 = vsel %vm406, %v946, %v948
      %v959 = vsel %vm406, %v948, %v950
      %v960 = vsel %vm406, %v950, %v952
      %v969 = vmax.f32 %v917, %v953
      %v970 = vmax.f32 %v918, %v954
      %v971 = vmax.f32 %v919, %v955
      %v972 = vmax.f32 %v920, %v956
      %v973 = vmax.f32 %v921, %v957
      %v974 = vmax.f32 %v922, %v958
      %v975 = vmax.f32 %v923, %v959
      %v976 = vmax.f32 %v924, %v960
      %v978 = vmax.f32 %v925, %v952
      %988 = vrot.lane.b32.xlu0 %v969, 98
      %v989 = vpop.permute.xlu0 %988
      %990 = vrot.lane.b32.xlu0 %v970, 98
      %v991 = vpop.permute.xlu0 %990
      %992 = vrot.lane.b32.xlu0 %v971, 98
      %v993 = vpop.permute.xlu0 %992
      %994 = vrot.lane.b32.xlu0 %v972, 98
      %v995 = vpop.permute.xlu0 %994
      %996 = vrot.lane.b32.xlu0 %v973, 98
      %v997 = vpop.permute.xlu0 %996
      %998 = vrot.lane.b32.xlu0 %v974, 98
      %v999 = vpop.permute.xlu0 %998
      %1000 = vrot.lane.b32.xlu0 %v975, 98
      %v1001 = vpop.permute.xlu0 %1000
      %1002 = vrot.lane.b32.xlu0 %v976, 98
      %v1003 = vpop.permute.xlu0 %1002
      %1004 = vrot.lane.b32.xlu0 %v978, 98
      %v1005 = vpop.permute.xlu0 %1004
      %v1006 = vsel %vm540, %v989, %v991
      %v1007 = vsel %vm540, %v991, %v993
      %v1008 = vsel %vm540, %v993, %v995
      %v1009 = vsel %vm540, %v995, %v997
      %v1010 = vsel %vm540, %v997, %v999
      %v1011 = vsel %vm540, %v999, %v1001
      %v1012 = vsel %vm540, %v1001, %v1003
      %v1013 = vsel %vm540, %v1003, %v1005
      %v1022 = vmax.f32 %v969, %v1006
      %v1023 = vmax.f32 %v970, %v1007
      %v1024 = vmax.f32 %v971, %v1008
      %v1025 = vmax.f32 %v972, %v1009
      %v1026 = vmax.f32 %v973, %v1010
      %v1027 = vmax.f32 %v974, %v1011
      %v1028 = vmax.f32 %v975, %v1012
      %v1029 = vmax.f32 %v976, %v1013
      %v1030 = vpack.c.bf16 %v1022, %v1022
      %v1031 = vpack.c.bf16 %v1023, %v1023
      %v1032 = vpack.c.bf16 %v1024, %v1024
      %v1033 = vpack.c.bf16 %v1025, %v1025
      %v1034 = vpack.c.bf16 %v1026, %v1026
      %v1035 = vpack.c.bf16 %v1027, %v1027
      %v1036 = vpack.c.bf16 %v1028, %v1028
      %v1037 = vpack.c.bf16 %v1029, %v1029
      %v1046 = vunpack.c.l.b16 %v1030
      %v1047 = vunpack.c.l.b16 %v1031
      %v1048 = vunpack.c.l.b16 %v1032
      %v1049 = vunpack.c.l.b16 %v1033
      %v1050 = vunpack.c.l.b16 %v1034
      %v1051 = vunpack.c.l.b16 %v1035
      %v1052 = vunpack.c.l.b16 %v1036
      %v1053 = vunpack.c.l.b16 %v1037
      %v1054 = vpack.c.b16 %v1047, %v1046
      %v1055 = vpack.c.b16 %v1049, %v1048
      %v1056 = vpack.c.b16 %v1051, %v1050
      %v1057 = vpack.c.b16 %v1053, %v1052
      %1062 = vst [vmem:[%s244] sm:$0xff] %v1054
      %1063 = vst [vmem:[%s244 + $0x8] sm:$0xff] %v1055
      %1064 = vst [vmem:[%s244 + $0x10] sm:$0xff] %v1056
      %1065 = vst [vmem:[%s244 + $0x18] sm:$0xff] %v1057
      %s1066 = smul.u32 8, %s15
      %p1067 = scmp.lt.s32.totalorder %s1066, 15
      %s1068 = scalar_select %p1067, %s1066, 15
      %s1069 = smul.addr %s1068, 4
      %s1070 = scalar_lea.vmem %s4, %s1069
      // Predicated region
      $region37: #{cnn_forward.3} parent=35 // pred_check
        %p1071 = pneg %p131
      $region38: #{cnn_forward.3} parent=35 // pred_check_branch
        %1073 = sbr.rel (%p1071) target = $region40
      $region39: #{cnn_forward.3} parent=35 // pred_region
        %s1074 = smul.u32 8, %s15
      $region40: #{cnn_forward.3} parent=35 // pred_fallthru
        _
    $region36: #{cnn_forward.3} parent=5 // pred_fallthru
      _
    %p1075 = scmp.le.s32.totalorder 2, %s10
    // Predicated region
    $region41: #{cnn_forward.3} parent=5 // pred_check
      %p1076 = pneg %p1075
    $region42: #{cnn_forward.3} parent=5 // pred_check_branch
      %1078 = sbr.rel (%p1076) target = $region44
    $region43: #{cnn_forward.3} parent=5 // pred_region
      %s1079 = ssub.s32 %s10, 2
      // Predicated region
      $region45: #{cnn_forward.3} parent=43 // pred_check
        %p1080 = pneg %p137
      $region46: #{cnn_forward.3} parent=43 // pred_check_branch
        %1082 = sbr.rel (%p1080) target = $region48
      $region47: #{cnn_forward.3} parent=43 // pred_region
        %s1083 = smul.u32 8, %s16
        %p1084 = scmp.lt.s32.totalorder %s1083, 15
        %s1085 = scalar_select %p1084, %s1083, 15
        %s1086 = smul.addr %s1085, 4
        %s1087 = scalar_lea.vmem %s4, %s1086
      $region48: #{cnn_forward.3} parent=43 // pred_fallthru
        _
    $region44: #{cnn_forward.3} parent=5 // pred_fallthru
      _
  $region6: #{cnn_forward.3} parent=0 // loop_footer
    %s14 = sadd.s32 1, %s10
  $region7: #{cnn_forward.3} parent=0 // loop_footer_branch
    %9 = sbr.rel target = $region3
  $region8: #{cnn_forward.3} parent=0 // loop_exit
    _

// kernel: cnn_forward.4
$region0: #{cnn_forward.4}
  #allocation0 [shape = 'u32[]', space=smem, size = 0x4, offset = 0x4, fixed_abs, tag = 'smem constant byte address 0x4 - core index']
  #allocation1 [shape = 'u32[144,128]{1,0:T(1,128)}', space=vmem, size = 0x12000, scoped, tag = 'internal scratch']
  %s0 = inlined_call_operand.vmem [shape: bf16[8,640], index: 0, kind: input, shape index: {}, may-alias: {0,1}]
  %s1 = inlined_call_operand.vmem [shape: bf16[8,640], index: 1, kind: input, shape index: {}, may-alias: {0,1}]
  %s2 = inlined_call_operand.vmem [shape: bf16[9,16,8], index: 2, kind: input, shape index: {}]
  %s3 = inlined_call_operand.vmem [shape: f32[16,1], index: 3, kind: input, shape index: {}]
  %s4 = inlined_call_operand.vmem [shape: bf16[16,512], index: 4, kind: output, shape index: {}]
  %s5 = sld [smem:[#allocation0]]
  $region83: #{cnn_forward.4} parent=0
    _
  %s7 = ssub.s32 1, %s5
  %s8 = scalar_select 0, %s7, %s5
  $region1: #{cnn_forward.4} parent=0
    #allocation2 [shape = 'u8[16384]{0}', space=vmem, size = 0x4000, scoped, tag = 'output window, operand 0']
    loop: start=0, step=1, limit=4
    $region2: #{cnn_forward.4} parent=1 // loop_pre_header
      _
    $region3: #{cnn_forward.4} parent=1 // loop_header
      %s10 = sphi 0, %s14
      %p11 = scmp.ge.s32.totalorder %s10, 4
      %s20 = sphi 0, %s22
      %s23 = sphi 0, %s20
      %s24 = sphi 0, %s23
      %s40 = sphi 0, %s24
      %s50 = sphi 0, %s52
      %s53 = sphi 0, %s50
      %s54 = sphi 0, %s53
      %s70 = sphi 0, %s54
      %s74 = sphi 0, %s74
      %s76 = sphi 0, %s74
      %s77 = sphi 0, %s76
      %s91 = sphi 0, %s77
      %s95 = sphi 0, %s95
      %s97 = sphi 0, %s95
      %s98 = sphi 0, %s97
      %s112 = sphi 0, %s98
      %s118 = sphi 0, %s120
      %s121 = sphi 0, %s118
      %s122 = sphi 0, %s121
      %s138 = sphi 0, %s122
    $region4: #{cnn_forward.4} parent=1 // loop_header_branch
      %13 = sbr.rel (%p11) target = $region8
    $region5: #{cnn_forward.4} parent=1 // loop_body
      %s15 = ssub.s32 %s10, 1
      %s16 = ssub.s32 %s10, 2
      %s17 = sadd.s32 %s10, 1
      %s18 = ssub.s32 %s10, %s17
      %p19 = scmp.eq.s32.totalorder %s18, 0
      %s21 = sadd.s32 %s20, 1
      %s22 = scalar_select %p19, %s20, %s21
      %p25 = pneg %p19
      %p26 = scmp.eq.s32.totalorder %s10, 1
      %p27 = por %p25, %p26
      %p28 = scmp.ne.s32.totalorder %s20, %s23
      %p29 = scmp.eq.s32.totalorder %s10, 0
      %p30 = por %p28, %p29
      %p31 = scmp.ne.s32.totalorder %s20, %s23
      %p32 = scmp.eq.s32.totalorder %s15, 1
      %p33 = por %p31, %p32
      %p34 = scmp.ne.s32.totalorder %s23, %s24
      %p35 = scmp.eq.s32.totalorder %s15, 0
      %p36 = por %p34, %p35
      %p37 = scmp.ne.s32.totalorder %s23, %s24
      %p38 = scmp.eq.s32.totalorder %s16, 1
      %p39 = por %p37, %p38
      %p41 = scmp.ne.s32.totalorder %s24, %s40
      %p42 = scmp.eq.s32.totalorder %s16, 0
      %p43 = por %p41, %p42
      %s44 = sadd.s32 %s10, 1
      %s45 = smul.u32 %s44, 2
      %s46 = sadd.s32 %s17, 1
      %s47 = smul.u32 %s46, 2
      %s48 = ssub.s32 %s45, %s47
      %p49 = scmp.eq.s32.totalorder %s48, 0
      %s51 = sadd.s32 %s50, 1
      %s52 = scalar_select %p49, %s50, %s51
      %p55 = pneg %p49
      %p56 = scmp.eq.s32.totalorder %s10, 1
      %p57 = por %p55, %p56
      %p58 = scmp.ne.s32.totalorder %s50, %s53
      %p59 = scmp.eq.s32.totalorder %s10, 0
      %p60 = por %p58, %p59
      %p61 = scmp.ne.s32.totalorder %s50, %s53
      %p62 = scmp.eq.s32.totalorder %s15, 1
      %p63 = por %p61, %p62
      %p64 = scmp.ne.s32.totalorder %s53, %s54
      %p65 = scmp.eq.s32.totalorder %s15, 0
      %p66 = por %p64, %p65
      %p67 = scmp.ne.s32.totalorder %s53, %s54
      %p68 = scmp.eq.s32.totalorder %s16, 1
      %p69 = por %p67, %p68
      %p71 = scmp.ne.s32.totalorder %s54, %s70
      %p72 = scmp.eq.s32.totalorder %s16, 0
      %p73 = por %p71, %p72
      %s75 = sadd.s32 %s74, 1
      %p78 = scmp.eq.s32.totalorder %s10, 1
      %p79 = scmp.ne.s32.totalorder %s74, %s76
      %p80 = scmp.eq.s32.totalorder %s10, 0
      %p81 = por %p79, %p80
      %p82 = scmp.ne.s32.totalorder %s74, %s76
      %p83 = scmp.eq.s32.totalorder %s15, 1
      %p84 = por %p82, %p83
      %p85 = scmp.ne.s32.totalorder %s76, %s77
      %p86 = scmp.eq.s32.totalorder %s15, 0
      %p87 = por %p85, %p86
      %p88 = scmp.ne.s32.totalorder %s76, %s77
      %p89 = scmp.eq.s32.totalorder %s16, 1
      %p90 = por %p88, %p89
      %p92 = scmp.ne.s32.totalorder %s77, %s91
      %p93 = scmp.eq.s32.totalorder %s16, 0
      %p94 = por %p92, %p93
      %s96 = sadd.s32 %s95, 1
      %p99 = scmp.eq.s32.totalorder %s10, 1
      %p100 = scmp.ne.s32.totalorder %s95, %s97
      %p101 = scmp.eq.s32.totalorder %s10, 0
      %p102 = por %p100, %p101
      %p103 = scmp.ne.s32.totalorder %s95, %s97
      %p104 = scmp.eq.s32.totalorder %s15, 1
      %p105 = por %p103, %p104
      %p106 = scmp.ne.s32.totalorder %s97, %s98
      %p107 = scmp.eq.s32.totalorder %s15, 0
      %p108 = por %p106, %p107
      %p109 = scmp.ne.s32.totalorder %s97, %s98
      %p110 = scmp.eq.s32.totalorder %s16, 1
      %p111 = por %p109, %p110
      %p113 = scmp.ne.s32.totalorder %s98, %s112
      %p114 = scmp.eq.s32.totalorder %s16, 0
      %p115 = por %p113, %p114
      %s116 = ssub.s32 %s10, %s17
      %p117 = scmp.eq.s32.totalorder %s116, 0
      %s119 = sadd.s32 %s118, 1
      %s120 = scalar_select %p117, %s118, %s119
      %p123 = pneg %p117
      %p124 = scmp.eq.s32.totalorder %s10, 1
      %p125 = por %p123, %p124
      %p126 = scmp.ne.s32.totalorder %s118, %s121
      %p127 = scmp.eq.s32.totalorder %s10, 0
      %p128 = por %p126, %p127
      %p129 = scmp.ne.s32.totalorder %s118, %s121
      %p130 = scmp.eq.s32.totalorder %s15, 1
      %p131 = por %p129, %p130
      %p132 = scmp.ne.s32.totalorder %s121, %s122
      %p133 = scmp.eq.s32.totalorder %s15, 0
      %p134 = por %p132, %p133
      %p135 = scmp.ne.s32.totalorder %s121, %s122
      %p136 = scmp.eq.s32.totalorder %s16, 1
      %p137 = por %p135, %p136
      %p139 = scmp.ne.s32.totalorder %s122, %s138
      %p140 = scmp.eq.s32.totalorder %s16, 0
      %p141 = por %p139, %p140
      %p142 = scmp.le.s32.totalorder 1, %s10
      %p143 = scmp.lt.s32.totalorder %s10, 3
      %p144 = pnand %p142, %p143
      %p145 = pneg %p144
      // Predicated region
      $region9: #{cnn_forward.4} parent=5 // pred_check
        _
      $region10: #{cnn_forward.4} parent=5 // pred_check_branch
        %147 = sbr.rel (%p144) target = $region12
      $region11: #{cnn_forward.4} parent=5 // pred_region
        %s148 = ssub.s32 %s10, 1
        // Predicated region
        $region13: #{cnn_forward.4} parent=11 // pred_check
          %p149 = pneg %p87
        $region14: #{cnn_forward.4} parent=11 // pred_check_branch
          %151 = sbr.rel (%p149) target = $region16
        $region15: #{cnn_forward.4} parent=11 // pred_region
          _
        $region16: #{cnn_forward.4} parent=11 // pred_fallthru
          _
        // Predicated region
        $region17: #{cnn_forward.4} parent=11 // pred_check
          %p152 = pneg %p108
        $region18: #{cnn_forward.4} parent=11 // pred_check_branch
          %154 = sbr.rel (%p152) target = $region20
        $region19: #{cnn_forward.4} parent=11 // pred_region
          _
        $region20: #{cnn_forward.4} parent=11 // pred_fallthru
          _
      $region12: #{cnn_forward.4} parent=5 // pred_fallthru
        _
      %p155 = scmp.lt.s32.totalorder %s10, 2
      // Predicated region
      $region21: #{cnn_forward.4} parent=5 // pred_check
        %p156 = pneg %p155
      $region22: #{cnn_forward.4} parent=5 // pred_check_branch
        %158 = sbr.rel (%p156) target = $region24
      $region23: #{cnn_forward.4} parent=5 // pred_region
        // Predicated region
        $region25: #{cnn_forward.4} parent=23 // pred_check
          %p159 = pneg %p30
        $region26: #{cnn_forward.4} parent=23 // pred_check_branch
          %161 = sbr.rel (%p159) target = $region28
        $region27: #{cnn_forward.4} parent=23 // pred_region
          %s162 = smul.u32 2, %s10
          %s163 = ssub.s32 5, %s162
          %p164 = scmp.lt.s32.totalorder %s163, 2
          %s165 = scalar_select %p164, %s163, 2
          %s166 = smul.u32 64, %s165
          %p167 = scmp.lt.s32.totalorder %s162, 4
          %s168 = scalar_select %p167, %s162, 4
          %s169 = smul.addr %s168, 4
          %s170 = scalar_lea.vmem %s0, %s169
          %s171 = smul.u32 2, %s10
          %s172 = ssub.s32 5, %s171
          %p173 = scmp.lt.s32.totalorder %s172, 2
          %s174 = scalar_select %p173, %s172, 2
          %s175 = smul.u32 64, %s174
        $region28: #{cnn_forward.4} parent=23 // pred_fallthru
          _
        // Predicated region
        $region29: #{cnn_forward.4} parent=23 // pred_check
          %p176 = pneg %p60
        $region30: #{cnn_forward.4} parent=23 // pred_check_branch
          %178 = sbr.rel (%p176) target = $region32
        $region31: #{cnn_forward.4} parent=23 // pred_region
          %s179 = sadd.s32 %s10, 1
          %s180 = smul.u32 %s179, 2
          %p181 = scmp.lt.s32.totalorder %s180, 4
          %s182 = scalar_select %p181, %s180, 4
          %s183 = smul.addr %s182, 4
          %s184 = scalar_lea.vmem %s1, %s183
          %s185 = sadd.s32 %s10, 1
          %s186 = smul.u32 %s185, 2
        $region32: #{cnn_forward.4} parent=23 // pred_fallthru
          _
      $region24: #{cnn_forward.4} parent=5 // pred_fallthru
        _
      %p187 = scmp.le.s32.totalorder 1, %s10
      %p188 = scmp.lt.s32.totalorder %s10, 3
      %p189 = pnand %p187, %p188
      %p190 = pneg %p189
      // Predicated region
      $region33: #{cnn_forward.4} parent=5 // pred_check
        _
      $region34: #{cnn_forward.4} parent=5 // pred_check_branch
        %192 = sbr.rel (%p189) target = $region36
      $region35: #{cnn_forward.4} parent=5 // pred_region
        %s193 = ssub.s32 %s10, 1
        %s194 = smul.u32 2, %s15
        %s195 = ssub.s32 5, %s194
        %p196 = scmp.lt.s32.totalorder %s195, 2
        %s197 = scalar_select %p196, %s195, 2
        %s198 = smul.u32 64, %s197
        %p199 = scmp.lt.s32.totalorder %s194, 4
        %s200 = scalar_select %p199, %s194, 4
        %s201 = smul.addr %s200, 4
        %s202 = scalar_lea.vmem %s0, %s201
        %p203 = pneg %p36
        %p204 = pneg %p33
        %s205 = sadd.s32 %s15, 1
        %s206 = smul.u32 %s205, 2
        %p207 = scmp.lt.s32.totalorder %s206, 4
        %s208 = scalar_select %p207, %s206, 4
        %s209 = smul.addr %s208, 4
        %s210 = scalar_lea.vmem %s1, %s209
        %p211 = pneg %p66
        %p212 = pneg %p63
        %p213 = pneg %p87
        %p214 = pneg %p84
        %p215 = pneg %p108
        %p216 = pneg %p105
        %p217 = pneg %p134
        %p218 = pneg %p131
        %s219 = sand.u32 %s121, 1
        %s220 = sand.u32 %s121, 1
        %s221 = smul.addr %s220, 16
        %s222 = scalar_lea.vmem [#allocation2], %s221
        %s223 = smul.u32 2, %s15
        %s224 = ssub.s32 5, %s223
        %p225 = scmp.lt.s32.totalorder %s224, 2
        %s226 = scalar_select %p225, %s224, 2
        %s227 = smul.u32 64, %s226
        %p228 = scmp.lt.s32.totalorder %s223, 4
        %s229 = scalar_select %p228, %s223, 4
        %s230 = smul.addr %s229, 4
        %s231 = scalar_lea.vmem %s0, %s230
        %s232 = smul.u32 2, %s15
        %s233 = ssub.s32 5, %s232
        %p234 = scmp.lt.s32.totalorder %s233, 2
        %s235 = scalar_select %p234, %s233, 2
        %s236 = smul.u32 64, %s235
        %s237 = sadd.s32 %s15, 1
        %s238 = smul.u32 %s237, 2
        %p239 = scmp.lt.s32.totalorder %s238, 4
        %s240 = scalar_select %p239, %s238, 4
        %s241 = smul.addr %s240, 4
        %s242 = scalar_lea.vmem %s1, %s241
        %s243 = sadd.s32 %s15, 1
        %s244 = smul.u32 %s243, 2
        %s245 = smul.u32 2, %s15
        %v247 = vld [vmem:[%s231] sm:$0xff]
        %v248 = vld [vmem:[%s242] sm:$0xf]
        %v250 = vunpack.c.l.b16 %v247
        %v251 = vunpack.c.h.b16 %v247
        %v252 = vpack.c.b16 %v250, %v250
        %v253 = vpack.c.b16 %v251, %v251
        %v254 = vld [vmem:[%s2] sm:$0xf]
        %v255 = vld [vmem:[%s2 + $0x4] sm:$0xf]
        %s256 = scalar_lea.vmem %s2, 8
        %v257 = vld [vmem:[%s256] sm:$0xf]
        %v258 = vld [vmem:[%s256 + $0x4] sm:$0xf]
        %v261 = vunpack.c.l.b16 %v257
        %v262 = vunpack.c.l.b16 %v258
        %v263 = vpack.c.b16 %v262, %v261
        %265 = vrot.lane.b32.xlu0 %v252, 127
        %v266 = vpop.permute.xlu0 %265
        %267 = vrot.lane.b32.xlu0 %v253, 127
        %v268 = vpop.permute.xlu0 %267
        %269 = vrot.lane.b32.xlu0 %v248, 127
        %v270 = vpop.permute.xlu0 %269
        %vm271 = vcmask 1039360
        %v272 = vsel %vm271, %v266, %v268
        %v273 = vsel %vm271, %v268, %v270
        %vm274 = vcmask 64512
        %v276 = vsel %vm274, %v263, 0
        %vm278 = vcmask 1043456
        %v280 = vsel %vm278, %v272, 0
        %v283 = vsel %vm278, %v273, 0
        %v286 = vsel %vm278, %v270, 0
        %288 = vmatprep.subr.bf16.mxu0 %v283
        %289 = vmatpush1.bf16.msra.mxu0 %v280
        %290 = vmatprep.subr.bf16.mxu0 0
        %291 = vmatpush1.bf16.msra.mxu0 0
        %292 = vmatprep.subr.bf16.mxu0 0
        %293 = vmatpush1.bf16.msra.mxu0 0
        %294 = vmatprep.subr.bf16.mxu0 0
        %295 = vmatpush1.bf16.msra.mxu0 0
        %296 = vmatprep.subr.bf16.mxu0 0
        %297 = vmatpush1.bf16.msra.mxu0 0
        %298 = vmatprep.subr.bf16.mxu0 0
        %299 = vmatpush1.bf16.msra.mxu0 0
        %300 = vmatprep.subr.bf16.mxu0 0
        %301 = vmatpush1.bf16.msra.mxu0 0
        %302 = vmatprep.subr.bf16.mxu0 0
        %303 = vmatpush1.bf16.msra.mxu0 0
        %304 = vmatprep.subr.bf16.mxu0 0
        %305 = vmatpush1.bf16.msra.mxu0 0
        %306 = vmatprep.subr.bf16.mxu0 0
        %307 = vmatpush1.bf16.msra.mxu0 0
        %308 = vmatprep.subr.bf16.mxu0 0
        %309 = vmatpush1.bf16.msra.mxu0 0
        %310 = vmatprep.subr.bf16.mxu0 0
        %311 = vmatpush1.bf16.msra.mxu0 0
        %312 = vmatprep.subr.bf16.mxu0 0
        %313 = vmatpush1.bf16.msra.mxu0 0
        %314 = vmatprep.subr.bf16.mxu0 0
        %315 = vmatpush1.bf16.msra.mxu0 0
        %316 = vmatprep.subr.bf16.mxu0 0
        %317 = vmatpush1.bf16.msra.mxu0 0
        %318 = vmatprep.subr.bf16.mxu0 0
        %319 = vmatpush1.bf16.msra.mxu0 0
        %320 = vmatprep.mubr.bf16.mxu0 0
        %321 = vmatmul.mubr.bf16.gmra.mrb[0].mxu0 %v276
        %v322 = vpop.f32.mrb[0].mxu0
        %v323 = vadd.f32 0.0, %v322
        %v324 = vpop.f32.mrb[0].mxu0
        %v325 = vadd.f32 0.0, %v324
        %v326 = vpop.f32.mrb[0].mxu0
        %v327 = vadd.f32 0.0, %v326
        %v328 = vpop.f32.mrb[0].mxu0
        %v329 = vadd.f32 0.0, %v328
        %330 = vdwg.mxu0
        %331 = vmatprep.subr.bf16.mxu0 0
        %332 = vmatpush1.bf16.msra.mxu0 %v286
        %333 = vmatprep.subr.bf16.mxu0 0
        %334 = vmatpush1.bf16.msra.mxu0 0
        %335 = vmatprep.subr.bf16.mxu0 0
        %336 = vmatpush1.bf16.msra.mxu0 0
        %337 = vmatprep.subr.bf16.mxu0 0
        %338 = vmatpush1.bf16.msra.mxu0 0
        %339 = vmatprep.subr.bf16.mxu0 0
        %340 = vmatpush1.bf16.msra.mxu0 0
        %341 = vmatprep.subr.bf16.mxu0 0
        %342 = vmatpush1.bf16.msra.mxu0 0
        %343 = vmatprep.subr.bf16.mxu0 0
        %344 = vmatpush1.bf16.msra.mxu0 0
        %345 = vmatprep.subr.bf16.mxu0 0
        %346 = vmatpush1.bf16.msra.mxu0 0
        %347 = vmatprep.subr.bf16.mxu0 0
        %348 = vmatpush1.bf16.msra.mxu0 0
        %349 = vmatprep.subr.bf16.mxu0 0
        %350 = vmatpush1.bf16.msra.mxu0 0
        %351 = vmatprep.subr.bf16.mxu0 0
        %352 = vmatpush1.bf16.msra.mxu0 0
        %353 = vmatprep.subr.bf16.mxu0 0
        %354 = vmatpush1.bf16.msra.mxu0 0
        %355 = vmatprep.subr.bf16.mxu0 0
        %356 = vmatpush1.bf16.msra.mxu0 0
        %357 = vmatprep.subr.bf16.mxu0 0
        %358 = vmatpush1.bf16.msra.mxu0 0
        %359 = vmatprep.subr.bf16.mxu0 0
        %360 = vmatpush1.bf16.msra.mxu0 0
        %361 = vmatprep.subr.bf16.mxu0 0
        %362 = vmatpush1.bf16.msra.mxu0 0
        %363 = vmatprep.mubr.bf16.mxu0 0
        %364 = vmatmul.mubr.bf16.gmra.mrb[0].mxu0 %v276
        %v365 = vpop.f32.mrb[0].mxu0
        %v366 = vadd.f32 0.0, %v365
        %v367 = vpop.f32.mrb[0].mxu0
        %v368 = vpop.f32.mrb[0].mxu0
        %v369 = vadd.f32 0.0, %v368
        %v370 = vpop.f32.mrb[0].mxu0
        %371 = vdwg.mxu0
        %v374 = vunpack.c.l.b16 %v254
        %v375 = vunpack.c.l.b16 %v255
        %v376 = vpack.c.b16 %v375, %v374
        %v378 = vsel %vm274, %v376, 0
        %v381 = vsel %vm278, %v252, 0
        %v384 = vsel %vm278, %v253, 0
        %v387 = vsel %vm278, %v248, 0
        %389 = vmatprep.subr.bf16.mxu0 %v384
        %390 = vmatpush1.bf16.msra.mxu0 %v381
        %391 = vmatprep.subr.bf16.mxu0 0
        %392 = vmatpush1.bf16.msra.mxu0 0
        %393 = vmatprep.subr.bf16.mxu0 0
        %394 = vmatpush1.bf16.msra.mxu0 0
        %395 = vmatprep.subr.bf16.mxu0 0
        %396 = vmatpush1.bf16.msra.mxu0 0
        %397 = vmatprep.subr.bf16.mxu0 0
        %398 = vmatpush1.bf16.msra.mxu0 0
        %399 = vmatprep.subr.bf16.mxu0 0
        %400 = vmatpush1.bf16.msra.mxu0 0
        %401 = vmatprep.subr.bf16.mxu0 0
        %402 = vmatpush1.bf16.msra.mxu0 0
        %403 = vmatprep.subr.bf16.mxu0 0
        %404 = vmatpush1.bf16.msra.mxu0 0
        %405 = vmatprep.subr.bf16.mxu0 0
        %406 = vmatpush1.bf16.msra.mxu0 0
        %407 = vmatprep.subr.bf16.mxu0 0
        %408 = vmatpush1.bf16.msra.mxu0 0
        %409 = vmatprep.subr.bf16.mxu0 0
        %410 = vmatpush1.bf16.msra.mxu0 0
        %411 = vmatprep.subr.bf16.mxu0 0
        %412 = vmatpush1.bf16.msra.mxu0 0
        %413 = vmatprep.subr.bf16.mxu0 0
        %414 = vmatpush1.bf16.msra.mxu0 0
        %415 = vmatprep.subr.bf16.mxu0 0
        %416 = vmatpush1.bf16.msra.mxu0 0
        %417 = vmatprep.subr.bf16.mxu0 0
        %418 = vmatpush1.bf16.msra.mxu0 0
        %419 = vmatprep.subr.bf16.mxu0 0
        %420 = vmatpush1.bf16.msra.mxu0 0
        %421 = vmatprep.mubr.bf16.mxu0 0
        %422 = vmatmul.mubr.bf16.gmra.mrb[0].mxu0 %v378
        %v423 = vpop.f32.mrb[0].mxu0
        %v424 = vadd.f32 %v323, %v423
        %v425 = vpop.f32.mrb[0].mxu0
        %v426 = vadd.f32 %v325, %v425
        %v427 = vpop.f32.mrb[0].mxu0
        %v428 = vadd.f32 %v327, %v427
        %v429 = vpop.f32.mrb[0].mxu0
        %v430 = vadd.f32 %v329, %v429
        %431 = vdwg.mxu0
        %432 = vmatprep.subr.bf16.mxu0 0
        %433 = vmatpush1.bf16.msra.mxu0 %v387
        %434 = vmatprep.subr.bf16.mxu0 0
        %435 = vmatpush1.bf16.msra.mxu0 0
        %436 = vmatprep.subr.bf16.mxu0 0
        %437 = vmatpush1.bf16.msra.mxu0 0
        %438 = vmatprep.subr.bf16.mxu0 0
        %439 = vmatpush1.bf16.msra.mxu0 0
        %440 = vmatprep.subr.bf16.mxu0 0
        %441 = vmatpush1.bf16.msra.mxu0 0
        %442 = vmatprep.subr.bf16.mxu0 0
        %443 = vmatpush1.bf16.msra.mxu0 0
        %444 = vmatprep.subr.bf16.mxu0 0
        %445 = vmatpush1.bf16.msra.mxu0 0
        %446 = vmatprep.subr.bf16.mxu0 0
        %447 = vmatpush1.bf16.msra.mxu0 0
        %448 = vmatprep.subr.bf16.mxu0 0
        %449 = vmatpush1.bf16.msra.mxu0 0
        %450 = vmatprep.subr.bf16.mxu0 0
        %451 = vmatpush1.bf16.msra.mxu0 0
        %452 = vmatprep.subr.bf16.mxu0 0
        %453 = vmatpush1.bf16.msra.mxu0 0
        %454 = vmatprep.subr.bf16.mxu0 0
        %455 = vmatpush1.bf16.msra.mxu0 0
        %456 = vmatprep.subr.bf16.mxu0 0
        %457 = vmatpush1.bf16.msra.mxu0 0
        %458 = vmatprep.subr.bf16.mxu0 0
        %459 = vmatpush1.bf16.msra.mxu0 0
        %460 = vmatprep.subr.bf16.mxu0 0
        %461 = vmatpush1.bf16.msra.mxu0 0
        %462 = vmatprep.subr.bf16.mxu0 0
        %463 = vmatpush1.bf16.msra.mxu0 0
        %464 = vmatprep.mubr.bf16.mxu0 0
        %465 = vmatmul.mubr.bf16.gmra.mrb[0].mxu0 %v378
        %v466 = vpop.f32.mrb[0].mxu0
        %v467 = vadd.f32 %v366, %v466
        %v468 = vpop.f32.mrb[0].mxu0
        %v469 = vpop.f32.mrb[0].mxu0
        %v470 = vadd.f32 %v369, %v469
        %v471 = vpop.f32.mrb[0].mxu0
        %472 = vdwg.mxu0
        %s473 = scalar_lea.vmem %s2, 16
        %v474 = vld [vmem:[%s473] sm:$0xf]
        %v475 = vld [vmem:[%s473 + $0x4] sm:$0xf]
        %v478 = vunpack.c.l.b16 %v474
        %v479 = vunpack.c.l.b16 %v475
        %v480 = vpack.c.b16 %v479, %v478
        %481 = vrot.lane.b32.xlu0 %v252, 126
        %v482 = vpop.permute.xlu0 %481
        %483 = vrot.lane.b32.xlu0 %v253, 126
        %v484 = vpop.permute.xlu0 %483
        %485 = vrot.lane.b32.xlu0 %v248, 126
        %v486 = vpop.permute.xlu0 %485
        %vm487 = vcmask 1031168
        %v488 = vsel %vm487, %v482, %v484
        %v489 = vsel %vm487, %v484, %v486
        %v491 = vsel %vm274, %v480, 0
        %v494 = vsel %vm278, %v488, 0
        %v497 = vsel %vm278, %v489, 0
        %v500 = vsel %vm278, %v486, 0
        %502 = vmatprep.subr.bf16.mxu0 %v497
        %503 = vmatpush1.bf16.msra.mxu0 %v494
        %504 = vmatprep.subr.bf16.mxu0 0
        %505 = vmatpush1.bf16.msra.mxu0 0
        %506 = vmatprep.subr.bf16.mxu0 0
        %507 = vmatpush1.bf16.msra.mxu0 0
        %508 = vmatprep.subr.bf16.mxu0 0
        %509 = vmatpush1.bf16.msra.mxu0 0
        %510 = vmatprep.subr.bf16.mxu0 0
        %511 = vmatpush1.bf16.msra.mxu0 0
        %512 = vmatprep.subr.bf16.mxu0 0
        %513 = vmatpush1.bf16.msra.mxu0 0
        %514 = vmatprep.subr.bf16.mxu0 0
        %515 = vmatpush1.bf16.msra.mxu0 0
        %516 = vmatprep.subr.bf16.mxu0 0
        %517 = vmatpush1.bf16.msra.mxu0 0
        %518 = vmatprep.subr.bf16.mxu0 0
        %519 = vmatpush1.bf16.msra.mxu0 0
        %520 = vmatprep.subr.bf16.mxu0 0
        %521 = vmatpush1.bf16.msra.mxu0 0
        %522 = vmatprep.subr.bf16.mxu0 0
        %523 = vmatpush1.bf16.msra.mxu0 0
        %524 = vmatprep.subr.bf16.mxu0 0
        %525 = vmatpush1.bf16.msra.mxu0 0
        %526 = vmatprep.subr.bf16.mxu0 0
        %527 = vmatpush1.bf16.msra.mxu0 0
        %528 = vmatprep.subr.bf16.mxu0 0
        %529 = vmatpush1.bf16.msra.mxu0 0
        %530 = vmatprep.subr.bf16.mxu0 0
        %531 = vmatpush1.bf16.msra.mxu0 0
        %532 = vmatprep.subr.bf16.mxu0 0
        %533 = vmatpush1.bf16.msra.mxu0 0
        %534 = vmatprep.mubr.bf16.mxu0 0
        %535 = vmatmul.mubr.bf16.gmra.mrb[0].mxu0 %v491
        %v536 = vpop.f32.mrb[0].mxu0
        %v537 = vadd.f32 0.0, %v536
        %v538 = vpop.f32.mrb[0].mxu0
        %v539 = vadd.f32 0.0, %v538
        %v540 = vpop.f32.mrb[0].mxu0
        %v541 = vadd.f32 0.0, %v540
        %v542 = vpop.f32.mrb[0].mxu0
        %v543 = vadd.f32 0.0, %v542
        %544 = vdwg.mxu0
        %545 = vmatprep.subr.bf16.mxu0 0
        %546 = vmatpush1.bf16.msra.mxu0 %v500
        %547 = vmatprep.subr.bf16.mxu0 0
        %548 = vmatpush1.bf16.msra.mxu0 0
        %549 = vmatprep.subr.bf16.mxu0 0
        %550 = vmatpush1.bf16.msra.mxu0 0
        %551 = vmatprep.subr.bf16.mxu0 0
        %552 = vmatpush1.bf16.msra.mxu0 0
        %553 = vmatprep.subr.bf16.mxu0 0
        %554 = vmatpush1.bf16.msra.mxu0 0
        %555 = vmatprep.subr.bf16.mxu0 0
        %556 = vmatpush1.bf16.msra.mxu0 0
        %557 = vmatprep.subr.bf16.mxu0 0
        %558 = vmatpush1.bf16.msra.mxu0 0
        %559 = vmatprep.subr.bf16.mxu0 0
        %560 = vmatpush1.bf16.msra.mxu0 0
        %561 = vmatprep.subr.bf16.mxu0 0
        %562 = vmatpush1.bf16.msra.mxu0 0
        %563 = vmatprep.subr.bf16.mxu0 0
        %564 = vmatpush1.bf16.msra.mxu0 0
        %565 = vmatprep.subr.bf16.mxu0 0
        %566 = vmatpush1.bf16.msra.mxu0 0
        %567 = vmatprep.subr.bf16.mxu0 0
        %568 = vmatpush1.bf16.msra.mxu0 0
        %569 = vmatprep.subr.bf16.mxu0 0
        %570 = vmatpush1.bf16.msra.mxu0 0
        %571 = vmatprep.subr.bf16.mxu0 0
        %572 = vmatpush1.bf16.msra.mxu0 0
        %573 = vmatprep.subr.bf16.mxu0 0
        %574 = vmatpush1.bf16.msra.mxu0 0
        %575 = vmatprep.subr.bf16.mxu0 0
        %576 = vmatpush1.bf16.msra.mxu0 0
        %577 = vmatprep.mubr.bf16.mxu0 0
        %578 = vmatmul.mubr.bf16.gmra.mrb[0].mxu0 %v491
        %v579 = vpop.f32.mrb[0].mxu0
        %v580 = vadd.f32 0.0, %v579
        %v581 = vpop.f32.mrb[0].mxu0
        %v582 = vpop.f32.mrb[0].mxu0
        %v583 = vadd.f32 0.0, %v582
        %v584 = vpop.f32.mrb[0].mxu0
        %585 = vdwg.mxu0
        %v586 = vadd.f32 %v424, %v537
        %v587 = vadd.f32 %v426, %v539
        %v588 = vadd.f32 %v467, %v580
        %v589 = vadd.f32 %v428, %v541
        %v590 = vadd.f32 %v430, %v543
        %v591 = vadd.f32 %v470, %v583
        %s592 = scalar_lea.vmem %s2, 24
        %v593 = vld [vmem:[%s592] sm:$0xf]
        %v594 = vld [vmem:[%s592 + $0x4] sm:$0xf]
        %v597 = vunpack.c.l.b16 %v593
        %v598 = vunpack.c.l.b16 %v594
        %v599 = vpack.c.b16 %v598, %v597
        %600 = vrot.lane.b32.xlu0 %v252, 112
        %v601 = vpop.permute.xlu0 %600
        %602 = vrot.lane.b32.xlu0 %v253, 112
        %v603 = vpop.permute.xlu0 %602
        %604 = vrot.lane.b32.xlu0 %v248, 112
        %v605 = vpop.permute.xlu0 %604
        %vm606 = vcmask 916480
        %v607 = vsel %vm606, %v601, %v603
        %v608 = vsel %vm606, %v603, %v605
        %v610 = vsel %vm274, %v599, 0
        %v613 = vsel %vm278, %v607, 0
        %v616 = vsel %vm278, %v608, 0
        %v619 = vsel %vm278, %v605, 0
        %621 = vmatprep.subr.bf16.mxu0 %v616
        %622 = vmatpush1.bf16.msra.mxu0 %v613
        %623 = vmatprep.subr.bf16.mxu0 0
        %624 = vmatpush1.bf16.msra.mxu0 0
        %625 = vmatprep.subr.bf16.mxu0 0
        %626 = vmatpush1.bf16.msra.mxu0 0
        %627 = vmatprep.subr.bf16.mxu0 0
        %628 = vmatpush1.bf16.msra.mxu0 0
        %629 = vmatprep.subr.bf16.mxu0 0
        %630 = vmatpush1.bf16.msra.mxu0 0
        %631 = vmatprep.subr.bf16.mxu0 0
        %632 = vmatpush1.bf16.msra.mxu0 0
        %633 = vmatprep.subr.bf16.mxu0 0
        %634 = vmatpush1.bf16.msra.mxu0 0
        %635 = vmatprep.subr.bf16.mxu0 0
        %636 = vmatpush1.bf16.msra.mxu0 0
        %637 = vmatprep.subr.bf16.mxu0 0
        %638 = vmatpush1.bf16.msra.mxu0 0
        %639 = vmatprep.subr.bf16.mxu0 0
        %640 = vmatpush1.bf16.msra.mxu0 0
        %641 = vmatprep.subr.bf16.mxu0 0
        %642 = vmatpush1.bf16.msra.mxu0 0
        %643 = vmatprep.subr.bf16.mxu0 0
        %644 = vmatpush1.bf16.msra.mxu0 0
        %645 = vmatprep.subr.bf16.mxu0 0
        %646 = vmatpush1.bf16.msra.mxu0 0
        %647 = vmatprep.subr.bf16.mxu0 0
        %648 = vmatpush1.bf16.msra.mxu0 0
        %649 = vmatprep.subr.bf16.mxu0 0
        %650 = vmatpush1.bf16.msra.mxu0 0
        %651 = vmatprep.subr.bf16.mxu0 0
        %652 = vmatpush1.bf16.msra.mxu0 0
        %653 = vmatprep.mubr.bf16.mxu0 0
        %654 = vmatmul.mubr.bf16.gmra.mrb[0].mxu0 %v610
        %v655 = vpop.f32.mrb[0].mxu0
        %v656 = vadd.f32 0.0, %v655
        %v657 = vpop.f32.mrb[0].mxu0
        %v658 = vadd.f32 0.0, %v657
        %v659 = vpop.f32.mrb[0].mxu0
        %v660 = vadd.f32 0.0, %v659
        %v661 = vpop.f32.mrb[0].mxu0
        %v662 = vadd.f32 0.0, %v661
        %663 = vdwg.mxu0
        %664 = vmatprep.subr.bf16.mxu0 0
        %665 = vmatpush1.bf16.msra.mxu0 %v619
        %666 = vmatprep.subr.bf16.mxu0 0
        %667 = vmatpush1.bf16.msra.mxu0 0
        %668 = vmatprep.subr.bf16.mxu0 0
        %669 = vmatpush1.bf16.msra.mxu0 0
        %670 = vmatprep.subr.bf16.mxu0 0
        %671 = vmatpush1.bf16.msra.mxu0 0
        %672 = vmatprep.subr.bf16.mxu0 0
        %673 = vmatpush1.bf16.msra.mxu0 0
        %674 = vmatprep.subr.bf16.mxu0 0
        %675 = vmatpush1.bf16.msra.mxu0 0
        %676 = vmatprep.subr.bf16.mxu0 0
        %677 = vmatpush1.bf16.msra.mxu0 0
        %678 = vmatprep.subr.bf16.mxu0 0
        %679 = vmatpush1.bf16.msra.mxu0 0
        %680 = vmatprep.subr.bf16.mxu0 0
        %681 = vmatpush1.bf16.msra.mxu0 0
        %682 = vmatprep.subr.bf16.mxu0 0
        %683 = vmatpush1.bf16.msra.mxu0 0
        %684 = vmatprep.subr.bf16.mxu0 0
        %685 = vmatpush1.bf16.msra.mxu0 0
        %686 = vmatprep.subr.bf16.mxu0 0
        %687 = vmatpush1.bf16.msra.mxu0 0
        %688 = vmatprep.subr.bf16.mxu0 0
        %689 = vmatpush1.bf16.msra.mxu0 0
        %690 = vmatprep.subr.bf16.mxu0 0
        %691 = vmatpush1.bf16.msra.mxu0 0
        %692 = vmatprep.subr.bf16.mxu0 0
        %693 = vmatpush1.bf16.msra.mxu0 0
        %694 = vmatprep.subr.bf16.mxu0 0
        %695 = vmatpush1.bf16.msra.mxu0 0
        %696 = vmatprep.mubr.bf16.mxu0 0
        %697 = vmatmul.mubr.bf16.gmra.mrb[0].mxu0 %v610
        %v698 = vpop.f32.mrb[0].mxu0
        %v699 = vadd.f32 0.0, %v698
        %v700 = vpop.f32.mrb[0].mxu0
        %v701 = vpop.f32.mrb[0].mxu0
        %v702 = vadd.f32 0.0, %v701
        %v703 = vpop.f32.mrb[0].mxu0
        %704 = vdwg.mxu0
        %v705 = vadd.f32 %v586, %v656
        %v706 = vadd.f32 %v587, %v658
        %v707 = vadd.f32 %v588, %v699
        %v708 = vadd.f32 %v589, %v660
        %v709 = vadd.f32 %v590, %v662
        %v710 = vadd.f32 %v591, %v702
        %s711 = scalar_lea.vmem %s2, 32
        %v712 = vld [vmem:[%s711] sm:$0xf]
        %v713 = vld [vmem:[%s711 + $0x4] sm:$0xf]
        %v716 = vunpack.c.l.b16 %v712
        %v717 = vunpack.c.l.b16 %v713
        %v718 = vpack.c.b16 %v717, %v716
        %719 = vrot.lane.b32.xlu0 %v252, 111
        %v720 = vpop.permute.xlu0 %719
        %721 = vrot.lane.b32.xlu0 %v253, 111
        %v722 = vpop.permute.xlu0 %721
        %723 = vrot.lane.b32.xlu0 %v248, 111
        %v724 = vpop.permute.xlu0 %723
        %vm725 = vcmask 908288
        %v726 = vsel %vm725, %v720, %v722
        %v727 = vsel %vm725, %v722, %v724
        %v729 = vsel %vm274, %v718, 0
        %v732 = vsel %vm278, %v726, 0
        %v735 = vsel %vm278, %v727, 0
        %v738 = vsel %vm278, %v724, 0
        %740 = vmatprep.subr.bf16.mxu0 %v735
        %741 = vmatpush1.bf16.msra.mxu0 %v732
        %742 = vmatprep.subr.bf16.mxu0 0
        %743 = vmatpush1.bf16.msra.mxu0 0
        %744 = vmatprep.subr.bf16.mxu0 0
        %745 = vmatpush1.bf16.msra.mxu0 0
        %746 = vmatprep.subr.bf16.mxu0 0
        %747 = vmatpush1.bf16.msra.mxu0 0
        %748 = vmatprep.subr.bf16.mxu0 0
        %749 = vmatpush1.bf16.msra.mxu0 0
        %750 = vmatprep.subr.bf16.mxu0 0
        %751 = vmatpush1.bf16.msra.mxu0 0
        %752 = vmatprep.subr.bf16.mxu0 0
        %753 = vmatpush1.bf16.msra.mxu0 0
        %754 = vmatprep.subr.bf16.mxu0 0
        %755 = vmatpush1.bf16.msra.mxu0 0
        %756 = vmatprep.subr.bf16.mxu0 0
        %757 = vmatpush1.bf16.msra.mxu0 0
        %758 = vmatprep.subr.bf16.mxu0 0
        %759 = vmatpush1.bf16.msra.mxu0 0
        %760 = vmatprep.subr.bf16.mxu0 0
        %761 = vmatpush1.bf16.msra.mxu0 0
        %762 = vmatprep.subr.bf16.mxu0 0
        %763 = vmatpush1.bf16.msra.mxu0 0
        %764 = vmatprep.subr.bf16.mxu0 0
        %765 = vmatpush1.bf16.msra.mxu0 0
        %766 = vmatprep.subr.bf16.mxu0 0
        %767 = vmatpush1.bf16.msra.mxu0 0
        %768 = vmatprep.subr.bf16.mxu0 0
        %769 = vmatpush1.bf16.msra.mxu0 0
        %770 = vmatprep.subr.bf16.mxu0 0
        %771 = vmatpush1.bf16.msra.mxu0 0
        %772 = vmatprep.mubr.bf16.mxu0 0
        %773 = vmatmul.mubr.bf16.gmra.mrb[0].mxu0 %v729
        %v774 = vpop.f32.mrb[0].mxu0
        %v775 = vadd.f32 0.0, %v774
        %v776 = vpop.f32.mrb[0].mxu0
        %v777 = vadd.f32 0.0, %v776
        %v778 = vpop.f32.mrb[0].mxu0
        %v779 = vadd.f32 0.0, %v778
        %v780 = vpop.f32.mrb[0].mxu0
        %v781 = vadd.f32 0.0, %v780
        %782 = vdwg.mxu0
        %783 = vmatprep.subr.bf16.mxu0 0
        %784 = vmatpush1.bf16.msra.mxu0 %v738
        %785 = vmatprep.subr.bf16.mxu0 0
        %786 = vmatpush1.bf16.msra.mxu0 0
        %787 = vmatprep.subr.bf16.mxu0 0
        %788 = vmatpush1.bf16.msra.mxu0 0
        %789 = vmatprep.subr.bf16.mxu0 0
        %790 = vmatpush1.bf16.msra.mxu0 0
        %791 = vmatprep.subr.bf16.mxu0 0
        %792 = vmatpush1.bf16.msra.mxu0 0
        %793 = vmatprep.subr.bf16.mxu0 0
        %794 = vmatpush1.bf16.msra.mxu0 0
        %795 = vmatprep.subr.bf16.mxu0 0
        %796 = vmatpush1.bf16.msra.mxu0 0
        %797 = vmatprep.subr.bf16.mxu0 0
        %798 = vmatpush1.bf16.msra.mxu0 0
        %799 = vmatprep.subr.bf16.mxu0 0
        %800 = vmatpush1.bf16.msra.mxu0 0
        %801 = vmatprep.subr.bf16.mxu0 0
        %802 = vmatpush1.bf16.msra.mxu0 0
        %803 = vmatprep.subr.bf16.mxu0 0
        %804 = vmatpush1.bf16.msra.mxu0 0
        %805 = vmatprep.subr.bf16.mxu0 0
        %806 = vmatpush1.bf16.msra.mxu0 0
        %807 = vmatprep.subr.bf16.mxu0 0
        %808 = vmatpush1.bf16.msra.mxu0 0
        %809 = vmatprep.subr.bf16.mxu0 0
        %810 = vmatpush1.bf16.msra.mxu0 0
        %811 = vmatprep.subr.bf16.mxu0 0
        %812 = vmatpush1.bf16.msra.mxu0 0
        %813 = vmatprep.subr.bf16.mxu0 0
        %814 = vmatpush1.bf16.msra.mxu0 0
        %815 = vmatprep.mubr.bf16.mxu0 0
        %816 = vmatmul.mubr.bf16.gmra.mrb[0].mxu0 %v729
        %v817 = vpop.f32.mrb[0].mxu0
        %v818 = vadd.f32 0.0, %v817
        %v819 = vpop.f32.mrb[0].mxu0
        %v820 = vpop.f32.mrb[0].mxu0
        %v821 = vadd.f32 0.0, %v820
        %v822 = vpop.f32.mrb[0].mxu0
        %823 = vdwg.mxu0
        %v824 = vadd.f32 %v705, %v775
        %v825 = vadd.f32 %v706, %v777
        %v826 = vadd.f32 %v707, %v818
        %v827 = vadd.f32 %v708, %v779
        %v828 = vadd.f32 %v709, %v781
        %v829 = vadd.f32 %v710, %v821
        %s830 = scalar_lea.vmem %s2, 40
        %v831 = vld [vmem:[%s830] sm:$0xf]
        %v832 = vld [vmem:[%s830 + $0x4] sm:$0xf]
        %v835 = vunpack.c.l.b16 %v831
        %v836 = vunpack.c.l.b16 %v832
        %v837 = vpack.c.b16 %v836, %v835
        %838 = vrot.lane.b32.xlu0 %v252, 110
        %v839 = vpop.permute.xlu0 %838
        %840 = vrot.lane.b32.xlu0 %v253, 110
        %v841 = vpop.permute.xlu0 %840
        %842 = vrot.lane.b32.xlu0 %v248, 110
        %v843 = vpop.permute.xlu0 %842
        %vm844 = vcmask 900096
        %v845 = vsel %vm844, %v839, %v841
        %v846 = vsel %vm844, %v841, %v843
        %v848 = vsel %vm274, %v837, 0
        %v851 = vsel %vm278, %v845, 0
        %v854 = vsel %vm278, %v846, 0
        %v857 = vsel %vm278, %v843, 0
        %859 = vmatprep.subr.bf16.mxu0 %v854
        %860 = vmatpush1.bf16.msra.mxu0 %v851
        %861 = vmatprep.subr.bf16.mxu0 0
        %862 = vmatpush1.bf16.msra.mxu0 0
        %863 = vmatprep.subr.bf16.mxu0 0
        %864 = vmatpush1.bf16.msra.mxu0 0
        %865 = vmatprep.subr.bf16.mxu0 0
        %866 = vmatpush1.bf16.msra.mxu0 0
        %867 = vmatprep.subr.bf16.mxu0 0
        %868 = vmatpush1.bf16.msra.mxu0 0
        %869 = vmatprep.subr.bf16.mxu0 0
        %870 = vmatpush1.bf16.msra.mxu0 0
        %871 = vmatprep.subr.bf16.mxu0 0
        %872 = vmatpush1.bf16.msra.mxu0 0
        %873 = vmatprep.subr.bf16.mxu0 0
        %874 = vmatpush1.bf16.msra.mxu0 0
        %875 = vmatprep.subr.bf16.mxu0 0
        %876 = vmatpush1.bf16.msra.mxu0 0
        %877 = vmatprep.subr.bf16.mxu0 0
        %878 = vmatpush1.bf16.msra.mxu0 0
        %879 = vmatprep.subr.bf16.mxu0 0
        %880 = vmatpush1.bf16.msra.mxu0 0
        %881 = vmatprep.subr.bf16.mxu0 0
        %882 = vmatpush1.bf16.msra.mxu0 0
        %883 = vmatprep.subr.bf16.mxu0 0
        %884 = vmatpush1.bf16.msra.mxu0 0
        %885 = vmatprep.subr.bf16.mxu0 0
        %886 = vmatpush1.bf16.msra.mxu0 0
        %887 = vmatprep.subr.bf16.mxu0 0
        %888 = vmatpush1.bf16.msra.mxu0 0
        %889 = vmatprep.subr.bf16.mxu0 0
        %890 = vmatpush1.bf16.msra.mxu0 0
        %891 = vmatprep.mubr.bf16.mxu0 0
        %892 = vmatmul.mubr.bf16.gmra.mrb[0].mxu0 %v848
        %v893 = vpop.f32.mrb[0].mxu0
        %v894 = vadd.f32 0.0, %v893
        %v895 = vpop.f32.mrb[0].mxu0
        %v896 = vadd.f32 0.0, %v895
        %v897 = vpop.f32.mrb[0].mxu0
        %v898 = vadd.f32 0.0, %v897
        %v899 = vpop.f32.mrb[0].mxu0
        %v900 = vadd.f32 0.0, %v899
        %901 = vdwg.mxu0
        %902 = vmatprep.subr.bf16.mxu0 0
        %903 = vmatpush1.bf16.msra.mxu0 %v857
        %904 = vmatprep.subr.bf16.mxu0 0
        %905 = vmatpush1.bf16.msra.mxu0 0
        %906 = vmatprep.subr.bf16.mxu0 0
        %907 = vmatpush1.bf16.msra.mxu0 0
        %908 = vmatprep.subr.bf16.mxu0 0
        %909 = vmatpush1.bf16.msra.mxu0 0
        %910 = vmatprep.subr.bf16.mxu0 0
        %911 = vmatpush1.bf16.msra.mxu0 0
        %912 = vmatprep.subr.bf16.mxu0 0
        %913 = vmatpush1.bf16.msra.mxu0 0
        %914 = vmatprep.subr.bf16.mxu0 0
        %915 = vmatpush1.bf16.msra.mxu0 0
        %916 = vmatprep.subr.bf16.mxu0 0
        %917 = vmatpush1.bf16.msra.mxu0 0
        %918 = vmatprep.subr.bf16.mxu0 0
        %919 = vmatpush1.bf16.msra.mxu0 0
        %920 = vmatprep.subr.bf16.mxu0 0
        %921 = vmatpush1.bf16.msra.mxu0 0
        %922 = vmatprep.subr.bf16.mxu0 0
        %923 = vmatpush1.bf16.msra.mxu0 0
        %924 = vmatprep.subr.bf16.mxu0 0
        %925 = vmatpush1.bf16.msra.mxu0 0
        %926 = vmatprep.subr.bf16.mxu0 0
        %927 = vmatpush1.bf16.msra.mxu0 0
        %928 = vmatprep.subr.bf16.mxu0 0
        %929 = vmatpush1.bf16.msra.mxu0 0
        %930 = vmatprep.subr.bf16.mxu0 0
        %931 = vmatpush1.bf16.msra.mxu0 0
        %932 = vmatprep.subr.bf16.mxu0 0
        %933 = vmatpush1.bf16.msra.mxu0 0
        %934 = vmatprep.mubr.bf16.mxu0 0
        %935 = vmatmul.mubr.bf16.gmra.mrb[0].mxu0 %v848
        %v936 = vpop.f32.mrb[0].mxu0
        %v937 = vadd.f32 0.0, %v936
        %v938 = vpop.f32.mrb[0].mxu0
        %v939 = vpop.f32.mrb[0].mxu0
        %v940 = vadd.f32 0.0, %v939
        %v941 = vpop.f32.mrb[0].mxu0
        %942 = vdwg.mxu0
        %v943 = vadd.f32 %v824, %v894
        %v944 = vadd.f32 %v825, %v896
        %v945 = vadd.f32 %v826, %v937
        %v946 = vadd.f32 %v827, %v898
        %v947 = vadd.f32 %v828, %v900
        %v948 = vadd.f32 %v829, %v940
        %s949 = scalar_lea.vmem %s2, 48
        %v950 = vld [vmem:[%s949] sm:$0xf]
        %v951 = vld [vmem:[%s949 + $0x4] sm:$0xf]
        %v954 = vunpack.c.l.b16 %v950
        %v955 = vunpack.c.l.b16 %v951
        %v956 = vpack.c.b16 %v955, %v954
        %957 = vrot.lane.b32.xlu0 %v252, 96
        %v958 = vpop.permute.xlu0 %957
        %959 = vrot.lane.b32.xlu0 %v253, 96
        %v960 = vpop.permute.xlu0 %959
        %961 = vrot.lane.b32.xlu0 %v248, 96
        %v962 = vpop.permute.xlu0 %961
        %vm963 = vcmask 785408
        %v964 = vsel %vm963, %v958, %v960
        %v965 = vsel %vm963, %v960, %v962
        %v967 = vsel %vm274, %v956, 0
        %v970 = vsel %vm278, %v964, 0
        %v973 = vsel %vm278, %v965, 0
        %v976 = vsel %vm278, %v962, 0
        %978 = vmatprep.subr.bf16.mxu0 %v973
        %979 = vmatpush1.bf16.msra.mxu0 %v970
        %980 = vmatprep.subr.bf16.mxu0 0
        %981 = vmatpush1.bf16.msra.mxu0 0
        %982 = vmatprep.subr.bf16.mxu0 0
        %983 = vmatpush1.bf16.msra.mxu0 0
        %984 = vmatprep.subr.bf16.mxu0 0
        %985 = vmatpush1.bf16.msra.mxu0 0
        %986 = vmatprep.subr.bf16.mxu0 0
        %987 = vmatpush1.bf16.msra.mxu0 0
        %988 = vmatprep.subr.bf16.mxu0 0
        %989 = vmatpush1.bf16.msra.mxu0 0
        %990 = vmatprep.subr.bf16.mxu0 0
        %991 = vmatpush1.bf16.msra.mxu0 0
        %992 = vmatprep.subr.bf16.mxu0 0
        %993 = vmatpush1.bf16.msra.mxu0 0
        %994 = vmatprep.subr.bf16.mxu0 0
        %995 = vmatpush1.bf16.msra.mxu0 0
        %996 = vmatprep.subr.bf16.mxu0 0
        %997 = vmatpush1.bf16.msra.mxu0 0
        %998 = vmatprep.subr.bf16.mxu0 0
        %999 = vmatpush1.bf16.msra.mxu0 0
        %1000 = vmatprep.subr.bf16.mxu0 0
        %1001 = vmatpush1.bf16.msra.mxu0 0
        %1002 = vmatprep.subr.bf16.mxu0 0
        %1003 = vmatpush1.bf16.msra.mxu0 0
        %1004 = vmatprep.subr.bf16.mxu0 0
        %1005 = vmatpush1.bf16.msra.mxu0 0
        %1006 = vmatprep.subr.bf16.mxu0 0
        %1007 = vmatpush1.bf16.msra.mxu0 0
        %1008 = vmatprep.subr.bf16.mxu0 0
        %1009 = vmatpush1.bf16.msra.mxu0 0
        %1010 = vmatprep.mubr.bf16.mxu0 0
        %1011 = vmatmul.mubr.bf16.gmra.mrb[0].mxu0 %v967
        %v1012 = vpop.f32.mrb[0].mxu0
        %v1013 = vadd.f32 0.0, %v1012
        %v1014 = vpop.f32.mrb[0].mxu0
        %v1015 = vadd.f32 0.0, %v1014
        %v1016 = vpop.f32.mrb[0].mxu0
        %v1017 = vadd.f32 0.0, %v1016
        %v1018 = vpop.f32.mrb[0].mxu0
        %v1019 = vadd.f32 0.0, %v1018
        %1020 = vdwg.mxu0
        %1021 = vmatprep.subr.bf16.mxu0 0
        %1022 = vmatpush1.bf16.msra.mxu0 %v976
        %1023 = vmatprep.subr.bf16.mxu0 0
        %1024 = vmatpush1.bf16.msra.mxu0 0
        %1025 = vmatprep.subr.bf16.mxu0 0
        %1026 = vmatpush1.bf16.msra.mxu0 0
        %1027 = vmatprep.subr.bf16.mxu0 0
        %1028 = vmatpush1.bf16.msra.mxu0 0
        %1029 = vmatprep.subr.bf16.mxu0 0
        %1030 = vmatpush1.bf16.msra.mxu0 0
        %1031 = vmatprep.subr.bf16.mxu0 0
        %1032 = vmatpush1.bf16.msra.mxu0 0
        %1033 = vmatprep.subr.bf16.mxu0 0
        %1034 = vmatpush1.bf16.msra.mxu0 0
        %1035 = vmatprep.subr.bf16.mxu0 0
        %1036 = vmatpush1.bf16.msra.mxu0 0
        %1037 = vmatprep.subr.bf16.mxu0 0
        %1038 = vmatpush1.bf16.msra.mxu0 0
        %1039 = vmatprep.subr.bf16.mxu0 0
        %1040 = vmatpush1.bf16.msra.mxu0 0
        %1041 = vmatprep.subr.bf16.mxu0 0
        %1042 = vmatpush1.bf16.msra.mxu0 0
        %1043 = vmatprep.subr.bf16.mxu0 0
        %1044 = vmatpush1.bf16.msra.mxu0 0
        %1045 = vmatprep.subr.bf16.mxu0 0
        %1046 = vmatpush1.bf16.msra.mxu0 0
        %1047 = vmatprep.subr.bf16.mxu0 0
        %1048 = vmatpush1.bf16.msra.mxu0 0
        %1049 = vmatprep.subr.bf16.mxu0 0
        %1050 = vmatpush1.bf16.msra.mxu0 0
        %1051 = vmatprep.subr.bf16.mxu0 0
        %1052 = vmatpush1.bf16.msra.mxu0 0
        %1053 = vmatprep.mubr.bf16.mxu0 0
        %1054 = vmatmul.mubr.bf16.gmra.mrb[0].mxu0 %v967
        %v1055 = vpop.f32.mrb[0].mxu0
        %v1056 = vadd.f32 0.0, %v1055
        %v1057 = vpop.f32.mrb[0].mxu0
        %v1058 = vpop.f32.mrb[0].mxu0
        %v1059 = vadd.f32 0.0, %v1058
        %v1060 = vpop.f32.mrb[0].mxu0
        %1061 = vdwg.mxu0
        %v1062 = vadd.f32 %v943, %v1013
        %v1063 = vadd.f32 %v944, %v1015
        %v1064 = vadd.f32 %v945, %v1056
        %v1065 = vadd.f32 %v946, %v1017
        %v1066 = vadd.f32 %v947, %v1019
        %v1067 = vadd.f32 %v948, %v1059
        %s1068 = scalar_lea.vmem %s2, 56
        %v1069 = vld [vmem:[%s1068] sm:$0xf]
        %v1070 = vld [vmem:[%s1068 + $0x4] sm:$0xf]
        %v1073 = vunpack.c.l.b16 %v1069
        %v1074 = vunpack.c.l.b16 %v1070
        %v1075 = vpack.c.b16 %v1074, %v1073
        %1076 = vrot.lane.b32.xlu0 %v252, 95
        %v1077 = vpop.permute.xlu0 %1076
        %1078 = vrot.lane.b32.xlu0 %v253, 95
        %v1079 = vpop.permute.xlu0 %1078
        %1080 = vrot.lane.b32.xlu0 %v248, 95
        %v1081 = vpop.permute.xlu0 %1080
        %vm1082 = vcmask 777216
        %v1083 = vsel %vm1082, %v1077, %v1079
        %v1084 = vsel %vm1082, %v1079, %v1081
        %v1086 = vsel %vm274, %v1075, 0
        %v1089 = vsel %vm278, %v1083, 0
        %v1092 = vsel %vm278, %v1084, 0
        %v1095 = vsel %vm278, %v1081, 0
        %1097 = vmatprep.subr.bf16.mxu0 %v1092
        %1098 = vmatpush1.bf16.msra.mxu0 %v1089
        %1099 = vmatprep.subr.bf16.mxu0 0
        %1100 = vmatpush1.bf16.msra.mxu0 0
        %1101 = vmatprep.subr.bf16.mxu0 0
        %1102 = vmatpush1.bf16.msra.mxu0 0
        %1103 = vmatprep.subr.bf16.mxu0 0
        %1104 = vmatpush1.bf16.msra.mxu0 0
        %1105 = vmatprep.subr.bf16.mxu0 0
        %1106 = vmatpush1.bf16.msra.mxu0 0
        %1107 = vmatprep.subr.bf16.mxu0 0
        %1108 = vmatpush1.bf16.msra.mxu0 0
        %1109 = vmatprep.subr.bf16.mxu0 0
        %1110 = vmatpush1.bf16.msra.mxu0 0
        %1111 = vmatprep.subr.bf16.mxu0 0
        %1112 = vmatpush1.bf16.msra.mxu0 0
        %1113 = vmatprep.subr.bf16.mxu0 0
        %1114 = vmatpush1.bf16.msra.mxu0 0
        %1115 = vmatprep.subr.bf16.mxu0 0
        %1116 = vmatpush1.bf16.msra.mxu0 0
        %1117 = vmatprep.subr.bf16.mxu0 0
        %1118 = vmatpush1.bf16.msra.mxu0 0
        %1119 = vmatprep.subr.bf16.mxu0 0
        %1120 = vmatpush1.bf16.msra.mxu0 0
        %1121 = vmatprep.subr.bf16.mxu0 0
        %1122 = vmatpush1.bf16.msra.mxu0 0
        %1123 = vmatprep.subr.bf16.mxu0 0
        %1124 = vmatpush1.bf16.msra.mxu0 0
        %1125 = vmatprep.subr.bf16.mxu0 0
        %1126 = vmatpush1.bf16.msra.mxu0 0
        %1127 = vmatprep.subr.bf16.mxu0 0
        %1128 = vmatpush1.bf16.msra.mxu0 0
        %1129 = vmatprep.mubr.bf16.mxu0 0
        %1130 = vmatmul.mubr.bf16.gmra.mrb[0].mxu0 %v1086
        %v1131 = vpop.f32.mrb[0].mxu0
        %v1132 = vadd.f32 0.0, %v1131
        %v1133 = vpop.f32.mrb[0].mxu0
        %v1134 = vadd.f32 0.0, %v1133
        %v1135 = vpop.f32.mrb[0].mxu0
        %v1136 = vadd.f32 0.0, %v1135
        %v1137 = vpop.f32.mrb[0].mxu0
        %v1138 = vadd.f32 0.0, %v1137
        %1139 = vdwg.mxu0
        %1140 = vmatprep.subr.bf16.mxu0 0
        %1141 = vmatpush1.bf16.msra.mxu0 %v1095
        %1142 = vmatprep.subr.bf16.mxu0 0
        %1143 = vmatpush1.bf16.msra.mxu0 0
        %1144 = vmatprep.subr.bf16.mxu0 0
        %1145 = vmatpush1.bf16.msra.mxu0 0
        %1146 = vmatprep.subr.bf16.mxu0 0
        %1147 = vmatpush1.bf16.msra.mxu0 0
        %1148 = vmatprep.subr.bf16.mxu0 0
        %1149 = vmatpush1.bf16.msra.mxu0 0
        %1150 = vmatprep.subr.bf16.mxu0 0
        %1151 = vmatpush1.bf16.msra.mxu0 0
        %1152 = vmatprep.subr.bf16.mxu0 0
        %1153 = vmatpush1.bf16.msra.mxu0 0
        %1154 = vmatprep.subr.bf16.mxu0 0
        %1155 = vmatpush1.bf16.msra.mxu0 0
        %1156 = vmatprep.subr.bf16.mxu0 0
        %1157 = vmatpush1.bf16.msra.mxu0 0
        %1158 = vmatprep.subr.bf16.mxu0 0
        %1159 = vmatpush1.bf16.msra.mxu0 0
        %1160 = vmatprep.subr.bf16.mxu0 0
        %1161 = vmatpush1.bf16.msra.mxu0 0
        %1162 = vmatprep.subr.bf16.mxu0 0
        %1163 = vmatpush1.bf16.msra.mxu0 0
        %1164 = vmatprep.subr.bf16.mxu0 0
        %1165 = vmatpush1.bf16.msra.mxu0 0
        %1166 = vmatprep.subr.bf16.mxu0 0
        %1167 = vmatpush1.bf16.msra.mxu0 0
        %1168 = vmatprep.subr.bf16.mxu0 0
        %1169 = vmatpush1.bf16.msra.mxu0 0
        %1170 = vmatprep.subr.bf16.mxu0 0
        %1171 = vmatpush1.bf16.msra.mxu0 0
        %1172 = vmatprep.mubr.bf16.mxu0 0
        %1173 = vmatmul.mubr.bf16.gmra.mrb[0].mxu0 %v1086
        %v1174 = vpop.f32.mrb[0].mxu0
        %v1175 = vadd.f32 0.0, %v1174
        %v1176 = vpop.f32.mrb[0].mxu0
        %v1177 = vpop.f32.mrb[0].mxu0
        %v1178 = vadd.f32 0.0, %v1177
        %v1179 = vpop.f32.mrb[0].mxu0
        %1180 = vdwg.mxu0
        %v1181 = vadd.f32 %v1062, %v1132
        %v1182 = vadd.f32 %v1063, %v1134
        %v1183 = vadd.f32 %v1064, %v1175
        %v1184 = vadd.f32 %v1065, %v1136
        %v1185 = vadd.f32 %v1066, %v1138
        %v1186 = vadd.f32 %v1067, %v1178
        %s1187 = scalar_lea.vmem %s2, 64
        %v1188 = vld [vmem:[%s1187] sm:$0xf]
        %v1189 = vld [vmem:[%s1187 + $0x4] sm:$0xf]
        %v1192 = vunpack.c.l.b16 %v1188
        %v1193 = vunpack.c.l.b16 %v1189
        %v1194 = vpack.c.b16 %v1193, %v1192
        %1195 = vrot.lane.b32.xlu0 %v252, 94
        %v1196 = vpop.permute.xlu0 %1195
        %1197 = vrot.lane.b32.xlu0 %v253, 94
        %v1198 = vpop.permute.xlu0 %1197
        %1199 = vrot.lane.b32.xlu0 %v248, 94
        %v1200 = vpop.permute.xlu0 %1199
        %vm1201 = vcmask 769024
        %v1202 = vsel %vm1201, %v1196, %v1198
        %v1203 = vsel %vm1201, %v1198, %v1200
        %v1205 = vsel %vm274, %v1194, 0
        %v1208 = vsel %vm278, %v1202, 0
        %v1211 = vsel %vm278, %v1203, 0
        %v1214 = vsel %vm278, %v1200, 0
        %1216 = vmatprep.subr.bf16.mxu0 %v1211
        %1217 = vmatpush1.bf16.msra.mxu0 %v1208
        %1218 = vmatprep.subr.bf16.mxu0 0
        %1219 = vmatpush1.bf16.msra.mxu0 0
        %1220 = vmatprep.subr.bf16.mxu0 0
        %1221 = vmatpush1.bf16.msra.mxu0 0
        %1222 = vmatprep.subr.bf16.mxu0 0
        %1223 = vmatpush1.bf16.msra.mxu0 0
        %1224 = vmatprep.subr.bf16.mxu0 0
        %1225 = vmatpush1.bf16.msra.mxu0 0
        %1226 = vmatprep.subr.bf16.mxu0 0
        %1227 = vmatpush1.bf16.msra.mxu0 0
        %1228 = vmatprep.subr.bf16.mxu0 0
        %1229 = vmatpush1.bf16.msra.mxu0 0
        %1230 = vmatprep.subr.bf16.mxu0 0
        %1231 = vmatpush1.bf16.msra.mxu0 0
        %1232 = vmatprep.subr.bf16.mxu0 0
        %1233 = vmatpush1.bf16.msra.mxu0 0
        %1234 = vmatprep.subr.bf16.mxu0 0
        %1235 = vmatpush1.bf16.msra.mxu0 0
        %1236 = vmatprep.subr.bf16.mxu0 0
        %1237 = vmatpush1.bf16.msra.mxu0 0
        %1238 = vmatprep.subr.bf16.mxu0 0
        %1239 = vmatpush1.bf16.msra.mxu0 0
        %1240 = vmatprep.subr.bf16.mxu0 0
        %1241 = vmatpush1.bf16.msra.mxu0 0
        %1242 = vmatprep.subr.bf16.mxu0 0
        %1243 = vmatpush1.bf16.msra.mxu0 0
        %1244 = vmatprep.subr.bf16.mxu0 0
        %1245 = vmatpush1.bf16.msra.mxu0 0
        %1246 = vmatprep.subr.bf16.mxu0 0
        %1247 = vmatpush1.bf16.msra.mxu0 0
        %1248 = vmatprep.mubr.bf16.mxu0 0
        %1249 = vmatmul.mubr.bf16.gmra.mrb[0].mxu0 %v1205
        %v1250 = vpop.f32.mrb[0].mxu0
        %v1251 = vadd.f32 0.0, %v1250
        %v1252 = vpop.f32.mrb[0].mxu0
        %v1253 = vadd.f32 0.0, %v1252
        %v1254 = vpop.f32.mrb[0].mxu0
        %v1255 = vadd.f32 0.0, %v1254
        %v1256 = vpop.f32.mrb[0].mxu0
        %v1257 = vadd.f32 0.0, %v1256
        %1258 = vdwg.mxu0
        %1259 = vmatprep.subr.bf16.mxu0 0
        %1260 = vmatpush1.bf16.msra.mxu0 %v1214
        %1261 = vmatprep.subr.bf16.mxu0 0
        %1262 = vmatpush1.bf16.msra.mxu0 0
        %1263 = vmatprep.subr.bf16.mxu0 0
        %1264 = vmatpush1.bf16.msra.mxu0 0
        %1265 = vmatprep.subr.bf16.mxu0 0
        %1266 = vmatpush1.bf16.msra.mxu0 0
        %1267 = vmatprep.subr.bf16.mxu0 0
        %1268 = vmatpush1.bf16.msra.mxu0 0
        %1269 = vmatprep.subr.bf16.mxu0 0
        %1270 = vmatpush1.bf16.msra.mxu0 0
        %1271 = vmatprep.subr.bf16.mxu0 0
        %1272 = vmatpush1.bf16.msra.mxu0 0
        %1273 = vmatprep.subr.bf16.mxu0 0
        %1274 = vmatpush1.bf16.msra.mxu0 0
        %1275 = vmatprep.subr.bf16.mxu0 0
        %1276 = vmatpush1.bf16.msra.mxu0 0
        %1277 = vmatprep.subr.bf16.mxu0 0
        %1278 = vmatpush1.bf16.msra.mxu0 0
        %1279 = vmatprep.subr.bf16.mxu0 0
        %1280 = vmatpush1.bf16.msra.mxu0 0
        %1281 = vmatprep.subr.bf16.mxu0 0
        %1282 = vmatpush1.bf16.msra.mxu0 0
        %1283 = vmatprep.subr.bf16.mxu0 0
        %1284 = vmatpush1.bf16.msra.mxu0 0
        %1285 = vmatprep.subr.bf16.mxu0 0
        %1286 = vmatpush1.bf16.msra.mxu0 0
        %1287 = vmatprep.subr.bf16.mxu0 0
        %1288 = vmatpush1.bf16.msra.mxu0 0
        %1289 = vmatprep.subr.bf16.mxu0 0
        %1290 = vmatpush1.bf16.msra.mxu0 0
        %1291 = vmatprep.mubr.bf16.mxu0 0
        %1292 = vmatmul.mubr.bf16.gmra.mrb[0].mxu0 %v1205
        %v1293 = vpop.f32.mrb[0].mxu0
        %v1294 = vadd.f32 0.0, %v1293
        %v1295 = vpop.f32.mrb[0].mxu0
        %v1296 = vpop.f32.mrb[0].mxu0
        %v1297 = vadd.f32 0.0, %v1296
        %v1298 = vpop.f32.mrb[0].mxu0
        %1299 = vdwg.mxu0
        %v1300 = vadd.f32 %v1181, %v1251
        %v1301 = vadd.f32 %v1182, %v1253
        %v1302 = vadd.f32 %v1183, %v1294
        %v1303 = vadd.f32 %v1184, %v1255
        %v1304 = vadd.f32 %v1185, %v1257
        %v1305 = vadd.f32 %v1186, %v1297
        %v1306 = vld [vmem:[%s3] sm:$0xff]
        %v1307 = vld [vmem:[%s3 + $0x8] sm:$0xff]
        %1309 = vset.pattern.permute.xlu0 0
        %1310 = vperm.xlu0 %1309, %v1306
        %v1311 = vpop.permute.xlu0 %1310
        %1314 = vset.pattern.permute.xlu0 0
        %1315 = vperm.xlu0 %1314, %v1307
        %v1316 = vpop.permute.xlu0 %1315
        %v1318 = vadd.f32 %v1300, %v1311
        %v1319 = vadd.f32 %v1301, %v1311
        %v1320 = vadd.f32 %v1302, %v1311
        %v1321 = vadd.f32 %v1303, %v1316
        %v1322 = vadd.f32 %v1304, %v1316
        %v1323 = vadd.f32 %v1305, %v1316
        %v1324 = vmax.f32 %v1318, 0.0
        %v1325 = vmax.f32 %v1319, 0.0
        %v1326 = vmax.f32 %v1320, 0.0
        %v1327 = vmax.f32 %v1321, 0.0
        %v1328 = vmax.f32 %v1322, 0.0
        %v1329 = vmax.f32 %v1323, 0.0
        %1336 = vrot.lane.b32.xlu0 %v1324, 127
        %v1337 = vpop.permute.xlu0 %1336
        %1338 = vrot.lane.b32.xlu0 %v1325, 127
        %v1339 = vpop.permute.xlu0 %1338
        %1340 = vrot.lane.b32.xlu0 %v1326, 127
        %v1341 = vpop.permute.xlu0 %1340
        %1342 = vrot.lane.b32.xlu0 %v1327, 127
        %v1343 = vpop.permute.xlu0 %1342
        %1344 = vrot.lane.b32.xlu0 %v1328, 127
        %v1345 = vpop.permute.xlu0 %1344
        %1346 = vrot.lane.b32.xlu0 %v1329, 127
        %v1347 = vpop.permute.xlu0 %1346
        %vm1348 = vcmask 1039360
        %v1349 = vsel %vm1348, %v1337, %v1339
        %v1350 = vsel %vm1348, %v1339, %v1341
        %v1351 = vsel %vm1348, %v1343, %v1345
        %v1352 = vsel %vm1348, %v1345, %v1347
        %v1357 = vmax.f32 %v1324, %v1349
        %v1358 = vmax.f32 %v1325, %v1350
        %v1359 = vmax.f32 %v1327, %v1351
        %v1360 = vmax.f32 %v1328, %v1352
        %v1363 = vmax.f32 %v1326, %v1341
        %v1364 = vmax.f32 %v1329, %v1347
        %1371 = vrot.lane.b32.xlu0 %v1357, 112
        %v1372 = vpop.permute.xlu0 %1371
        %1373 = vrot.lane.b32.xlu0 %v1358, 112
        %v1374 = vpop.permute.xlu0 %1373
        %1375 = vrot.lane.b32.xlu0 %v1363, 112
        %v1376 = vpop.permute.xlu0 %1375
        %1377 = vrot.lane.b32.xlu0 %v1359, 112
        %v1378 = vpop.permute.xlu0 %1377
        %1379 = vrot.lane.b32.xlu0 %v1360, 112
        %v1380 = vpop.permute.xlu0 %1379
        %1381 = vrot.lane.b32.xlu0 %v1364, 112
        %v1382 = vpop.permute.xlu0 %1381
        %vm1383 = vcmask 916480
        %v1384 = vsel %vm1383, %v1372, %v1374
        %v1385 = vsel %vm1383, %v1374, %v1376
        %v1386 = vsel %vm1383, %v1378, %v1380
        %v1387 = vsel %vm1383, %v1380, %v1382
        %v1392 = vmax.f32 %v1357, %v1384
        %v1393 = vmax.f32 %v1358, %v1385
        %v1394 = vmax.f32 %v1359, %v1386
        %v1395 = vmax.f32 %v1360, %v1387
        %v1396 = vpack.c.bf16 %v1394, %v1392
        %v1397 = vpack.c.bf16 %v1395, %v1393
        %v1400 = vunpack.c.l.b16 %v1396
        %v1401 = vunpack.c.l.b16 %v1397
        %v1402 = vunpack.c.h.b16 %v1396
        %v1403 = vunpack.c.h.b16 %v1397
        %v1404 = vpack.c.b16 %v1401, %v1400
        %v1405 = vpack.c.b16 %v1403, %v1402
        %1408 = vst [vmem:[%s222] sm:$0xff] %v1404
        %1409 = vst [vmem:[%s222 + $0x8] sm:$0xff] %v1405
        %s1410 = sand.u32 %s121, 1
        %s1411 = sand.u32 %s121, 1
        %s1412 = smul.addr %s1411, 16
        %s1413 = scalar_lea.vmem [#allocation2], %s1412
        // Predicated region
        $region37: #{cnn_forward.4} parent=35 // pred_check
          %p1414 = pneg %p131
        $region38: #{cnn_forward.4} parent=35 // pred_check_branch
          %1416 = sbr.rel (%p1414) target = $region40
        $region39: #{cnn_forward.4} parent=35 // pred_region
          %s1417 = smul.u32 2, %s15
          %s1418 = smul.addr %s1417, 4
          %s1419 = scalar_lea.vmem %s4, %s1418
          // Predicated region
          $region41: #{cnn_forward.4} parent=39 // pred_check
            _
          $region42: #{cnn_forward.4} parent=39 // pred_check_branch
            %1421 = sbr.rel (0) target = $region44
          $region43: #{cnn_forward.4} parent=39 // pred_region
            // Predicated region
            $region45: #{cnn_forward.4} parent=43 // pred_check
              _
            $region46: #{cnn_forward.4} parent=43 // pred_check_branch
              %1423 = sbr.rel (0) target = $region48
            $region47: #{cnn_forward.4} parent=43 // pred_region
              // Predicated region
              $region60: #{cnn_forward.4} parent=47 // pred_check
                _
              $region61: #{cnn_forward.4} parent=47 // pred_check_branch
                %1440 = sbr.rel (0) target = $region63
              $region62: #{cnn_forward.4} parent=47 // pred_region
                loop: start=0, step=1, limit=1
                $region64: #{cnn_forward.4} parent=62 // loop_pre_header
                  _
                $region65: #{cnn_forward.4} parent=62 // loop_header
                  %s1442 = sphi 0, %s1446
                  %p1443 = scmp.ge.s32.totalorder %s1442, 1
                  %s1447 = sphi %s1413, %s1413
                  %s1448 = sphi %s1419, %s1419
                $region66: #{cnn_forward.4} parent=62 // loop_header_branch
                  %1445 = sbr.rel (%p1443) target = $region70
                $region67: #{cnn_forward.4} parent=62 // loop_body
                  %v1449 = vld [vmem:[%s1447] sm:$0xff]
                  %1450 = vst [vmem:[%s1448] sm:$0xff] %v1449
                  %v1451 = vld [vmem:[%s1447 + $0x8] sm:$0xff]
                  %1452 = vst [vmem:[%s1448 + $0x10] sm:$0xff] %v1451
                $region68: #{cnn_forward.4} parent=62 // loop_footer
                  %s1446 = sadd.s32 1, %s1442
                $region69: #{cnn_forward.4} parent=62 // loop_footer_branch
                  %1441 = sbr.rel target = $region65
                $region70: #{cnn_forward.4} parent=62 // loop_exit
                  _
              $region63: #{cnn_forward.4} parent=47 // pred_fallthru
                _
              // Predicated region
              $region71: #{cnn_forward.4} parent=47 // pred_check
                _
              $region72: #{cnn_forward.4} parent=47 // pred_check_branch
                %1454 = sbr.rel target = $region74
              $region73: #{cnn_forward.4} parent=47 // pred_region
                _
              $region74: #{cnn_forward.4} parent=47 // pred_fallthru
                _
            $region48: #{cnn_forward.4} parent=43 // pred_fallthru
              _
            // Predicated region
            $region49: #{cnn_forward.4} parent=43 // pred_check
              _
            $region50: #{cnn_forward.4} parent=43 // pred_check_branch
              %1425 = sbr.rel target = $region52
            $region51: #{cnn_forward.4} parent=43 // pred_region
              loop: start=0, step=1, limit=1
              $region53: #{cnn_forward.4} parent=51 // loop_pre_header
                _
              $region54: #{cnn_forward.4} parent=51 // loop_header
                %s1428 = sphi 0, %s1432
                %p1429 = scmp.ge.s32.totalorder %s1428, 1
                %s1433 = sphi %s1413, %s1413
                %s1434 = sphi %s1419, %s1419
              $region55: #{cnn_forward.4} parent=51 // loop_header_branch
                %1431 = sbr.rel (%p1429) target = $region59
              $region56: #{cnn_forward.4} parent=51 // loop_body
                %v1435 = vld [vmem:[%s1433] sm:$0xff]
                %1436 = vst [vmem:[%s1434] sm:$0xff] %v1435
                %v1437 = vld [vmem:[%s1433 + $0x8] sm:$0xff]
                %1438 = vst [vmem:[%s1434 + $0x10] sm:$0xff] %v1437
              $region57: #{cnn_forward.4} parent=51 // loop_footer
                %s1432 = sadd.s32 1, %s1428
              $region58: #{cnn_forward.4} parent=51 // loop_footer_branch
                %1427 = sbr.rel target = $region54
              $region59: #{cnn_forward.4} parent=51 // loop_exit
                _
            $region52: #{cnn_forward.4} parent=43 // pred_fallthru
              _
          $region44: #{cnn_forward.4} parent=39 // pred_fallthru
            _
          %1455 = vnop
        $region40: #{cnn_forward.4} parent=35 // pred_fallthru
          _
      $region36: #{cnn_forward.4} parent=5 // pred_fallthru
        _
      %p1456 = scmp.le.s32.totalorder 2, %s10
      // Predicated region
      $region75: #{cnn_forward.4} parent=5 // pred_check
        %p1457 = pneg %p1456
      $region76: #{cnn_forward.4} parent=5 // pred_check_branch
        %1459 = sbr.rel (%p1457) target = $region78
      $region77: #{cnn_forward.4} parent=5 // pred_region
        %s1460 = ssub.s32 %s10, 2
        // Predicated region
        $region79: #{cnn_forward.4} parent=77 // pred_check
          %p1461 = pneg %p137
        $region80: #{cnn_forward.4} parent=77 // pred_check_branch
          %1463 = sbr.rel (%p1461) target = $region82
        $region81: #{cnn_forward.4} parent=77 // pred_region
          %s1464 = sand.u32 %s122, 1
          %s1465 = sand.u32 %s122, 1
          %s1466 = smul.addr %s1465, 16
          %s1467 = scalar_lea.vmem [#allocation2], %s1466
        $region82: #{cnn_forward.4} parent=77 // pred_fallthru
          _
      $region78: #{cnn_forward.4} parent=5 // pred_fallthru
        _
    $region6: #{cnn_forward.4} parent=1 // loop_footer
      %s14 = sadd.s32 1, %s10
    $region7: #{cnn_forward.4} parent=1 // loop_footer_branch
      %9 = sbr.rel target = $region3
    $region8: #{cnn_forward.4} parent=1 // loop_exit
      _

// kernel: cnn_forward.5
$region0: #{cnn_forward.5}
  #allocation0 [shape = 'u32[]', space=smem, size = 0x4, offset = 0x4, fixed_abs, tag = 'smem constant byte address 0x4 - core index']
  #allocation1 [shape = 'u32[144,128]{1,0:T(1,128)}', space=vmem, size = 0x12000, scoped, tag = 'internal scratch']
  %s0 = inlined_call_operand.vmem [shape: bf16[2,784], index: 0, kind: input, shape index: {}]
  %s1 = inlined_call_operand.vmem [shape: bf16[10,784], index: 1, kind: input, shape index: {}]
  %s2 = inlined_call_operand.vmem [shape: f32[1,10], index: 2, kind: input, shape index: {}]
  %s3 = inlined_call_operand.hbm [shape: f32[2,10], index: 3, kind: output, shape index: {}]
  %s4 = sld [smem:[#allocation0]]
  $region22: #{cnn_forward.5} parent=0
    _
  %s6 = ssub.s32 1, %s4
  %s7 = scalar_select 0, %s6, %s4
  $region1: #{cnn_forward.5} parent=0
    #allocation2 [shape = 'u8[1024]{0}', space=vmem, size = 0x400, scoped, tag = 'output window, operand 0, single buffered']
    #allocation3 [shape = 's32[1]{0}', space=sflag, size = 0x4, scoped, tag = 'scoped memory for cnn_forward.5']
    %8 = vsyncpa [#allocation3], 0
    // Predicated region
    $region2: #{cnn_forward.5} parent=1 // pred_check
      _
    $region3: #{cnn_forward.5} parent=1 // pred_check_branch
      %10 = sbr.rel (0) target = $region5
    $region4: #{cnn_forward.5} parent=1 // pred_region
      _
    $region5: #{cnn_forward.5} parent=1 // pred_fallthru
      _
    // Predicated region
    $region6: #{cnn_forward.5} parent=1 // pred_check
      _
    $region7: #{cnn_forward.5} parent=1 // pred_check_branch
      %12 = sbr.rel (0) target = $region9
    $region8: #{cnn_forward.5} parent=1 // pred_region
      _
    $region9: #{cnn_forward.5} parent=1 // pred_fallthru
      _
    // Predicated region
    $region10: #{cnn_forward.5} parent=1 // pred_check
      _
    $region11: #{cnn_forward.5} parent=1 // pred_check_branch
      %14 = sbr.rel (0) target = $region13
    $region12: #{cnn_forward.5} parent=1 // pred_region
      _
    $region13: #{cnn_forward.5} parent=1 // pred_fallthru
      _
    %v16 = vld [vmem:[%s0] sm:$0x7f]
    %v17 = vld [vmem:[%s1] sm:$0xff]
    %v18 = vld [vmem:[%s1 + $0x8] sm:$0xff]
    %v19 = vld [vmem:[%s1 + $0x10] sm:$0xff]
    %v20 = vld [vmem:[%s1 + $0x18] sm:$0xf]
    %v21 = vld [vmem:[%s1 + $0x1c] sm:$0x11]
    %v22 = vld [vmem:[%s1 + $0x24] sm:$0x11]
    %v23 = vld [vmem:[%s1 + $0x2c] sm:$0x11]
    %v24 = vld [vmem:[%s1 + $0x34] sm:$0x1]
    %v25 = vld [vmem:[%s2] sm:$0x1]
    %v27 = vlaneseq
    %v28 = vshrl.u32 %v27, 7
    %v29 = vsub.s32 0, %v28
    %v30 = vrot.slane %v25, %v29
    %v33 = vcombine.high %v16, %v16
    %v35 = vunpack.c.l.s4 1966171168
    %v36 = vunpack.c.0.s8 %v35
    %v37 = vlaneseq
    %v38 = vshrl.u32 %v37, 7
    %v39 = vsub.s32 %v36, %v38
    %v40 = vrot.slane %v16, %v39
    %v42 = vunpack.c.l.s4 1966171168
    %v43 = vunpack.c.0.s8 %v42
    %v44 = vlaneseq
    %v45 = vshrl.u32 %v44, 7
    %v46 = vsub.s32 %v43, %v45
    %v47 = vrot.slane %v33, %v46
    %v48 = vcombine.high %v40, %v40
    %v49 = vcombine.high %v47, %v47
    %v51 = vunpack.c.l.s4 1966171168
    %v52 = vunpack.c.0.s8 %v51
    %v53 = vlaneseq
    %v54 = vshrl.u32 %v53, 7
    %v55 = vsub.s32 %v52, %v54
    %v56 = vrot.slane %v40, %v55
    %v58 = vunpack.c.l.s4 1966171168
    %v59 = vunpack.c.0.s8 %v58
    %v60 = vlaneseq
    %v61 = vshrl.u32 %v60, 7
    %v62 = vsub.s32 %v59, %v61
    %v63 = vrot.slane %v47, %v62
    %v65 = vunpack.c.l.s4 1966171168
    %v66 = vunpack.c.0.s8 %v65
    %v67 = vlaneseq
    %v68 = vshrl.u32 %v67, 7
    %v69 = vsub.s32 %v66, %v68
    %v70 = vrot.slane %v48, %v69
    %v72 = vunpack.c.l.s4 1966171168
    %v73 = vunpack.c.0.s8 %v72
    %v74 = vlaneseq
    %v75 = vshrl.u32 %v74, 7
    %v76 = vsub.s32 %v73, %v75
    %v77 = vrot.slane %v49, %v76
    %v78 = vcombine.high %v56, %v56
    %v79 = vcombine.high %v63, %v63
    %v80 = vcombine.high %v70, %v70
    %v95 = vunpack.c.l.b16 %v17
    %v96 = vunpack.c.h.b16 %v17
    %v97 = vunpack.c.l.b16 %v18
    %v98 = vunpack.c.h.b16 %v18
    %v99 = vunpack.c.l.b16 %v19
    %v100 = vunpack.c.h.b16 %v19
    %v101 = vunpack.c.l.b16 %v20
    %v102 = vunpack.c.l.b16 %v21
    %v103 = vunpack.c.h.b16 %v21
    %v104 = vunpack.c.l.b16 %v22
    %v105 = vunpack.c.h.b16 %v22
    %v106 = vunpack.c.l.b16 %v23
    %v107 = vunpack.c.h.b16 %v23
    %v108 = vunpack.c.l.b16 %v24
    %v109 = vpack.c.b16 %v102, %v95
    %v110 = vpack.c.b16 %v103, %v96
    %v111 = vpack.c.b16 %v104, %v97
    %v112 = vpack.c.b16 %v105, %v98
    %v113 = vpack.c.b16 %v106, %v99
    %v114 = vpack.c.b16 %v107, %v100
    %v115 = vpack.c.b16 %v108, %v101
    %vm122 = vcmask 130048
    %v124 = vsel %vm122, %v79, 0
    %v127 = vsel %vm122, %v115, 0
    %129 = vmatprep.subr.bf16.mxu0 %v110
    %130 = vmatpush1.bf16.xpose.msra.mxu0 %v109
    %131 = vmatprep.subr.bf16.mxu0 0
    %132 = vmatpush1.bf16.xpose.msra.mxu0 0
    %133 = vmatprep.subr.bf16.mxu0 0
    %134 = vmatpush1.bf16.xpose.msra.mxu0 0
    %135 = vmatprep.subr.bf16.mxu0 0
    %136 = vmatpush1.bf16.xpose.msra.mxu0 0
    %137 = vmatprep.subr.bf16.mxu0 0
    %138 = vmatpush1.bf16.xpose.msra.mxu0 0
    %139 = vmatprep.subr.bf16.mxu0 0
    %140 = vmatpush1.bf16.xpose.msra.mxu0 0
    %141 = vmatprep.subr.bf16.mxu0 0
    %142 = vmatpush1.bf16.xpose.msra.mxu0 0
    %143 = vmatprep.subr.bf16.mxu0 0
    %144 = vmatpush1.bf16.xpose.msra.mxu0 0
    %145 = vmatprep.subr.bf16.mxu0 0
    %146 = vmatpush1.bf16.xpose.msra.mxu0 0
    %147 = vmatprep.subr.bf16.mxu0 0
    %148 = vmatpush1.bf16.xpose.msra.mxu0 0
    %149 = vmatprep.subr.bf16.mxu0 0
    %150 = vmatpush1.bf16.xpose.msra.mxu0 0
    %151 = vmatprep.subr.bf16.mxu0 0
    %152 = vmatpush1.bf16.xpose.msra.mxu0 0
    %153 = vmatprep.subr.bf16.mxu0 0
    %154 = vmatpush1.bf16.xpose.msra.mxu0 0
    %155 = vmatprep.subr.bf16.mxu0 0
    %156 = vmatpush1.bf16.xpose.msra.mxu0 0
    %157 = vmatprep.subr.bf16.mxu0 0
    %158 = vmatpush1.bf16.xpose.msra.mxu0 0
    %159 = vmatprep.subr.bf16.mxu0 0
    %160 = vmatpush1.bf16.xpose.msra.mxu0 0
    %161 = vmatprep.mubr.bf16.mxu0 %v70
    %162 = vmatmul.mubr.bf16.gmra.mrb[0].mxu0 %v56
    %v163 = vpop.f32.mrb[0].mxu0
    %v164 = vadd.f32 %v30, %v163
    %v165 = vpop.f32.mrb[0].mxu0
    %v166 = vpop.f32.mrb[0].mxu0
    %v167 = vpop.f32.mrb[0].mxu0
    %168 = vdwg.mxu0
    %169 = vmatprep.subr.bf16.mxu0 %v112
    %170 = vmatpush1.bf16.xpose.msra.mxu0 %v111
    %171 = vmatprep.subr.bf16.mxu0 0
    %172 = vmatpush1.bf16.xpose.msra.mxu0 0
    %173 = vmatprep.subr.bf16.mxu0 0
    %174 = vmatpush1.bf16.xpose.msra.mxu0 0
    %175 = vmatprep.subr.bf16.mxu0 0
    %176 = vmatpush1.bf16.xpose.msra.mxu0 0
    %177 = vmatprep.subr.bf16.mxu0 0
    %178 = vmatpush1.bf16.xpose.msra.mxu0 0
    %179 = vmatprep.subr.bf16.mxu0 0
    %180 = vmatpush1.bf16.xpose.msra.mxu0 0
    %181 = vmatprep.subr.bf16.mxu0 0
    %182 = vmatpush1.bf16.xpose.msra.mxu0 0
    %183 = vmatprep.subr.bf16.mxu0 0
    %184 = vmatpush1.bf16.xpose.msra.mxu0 0
    %185 = vmatprep.subr.bf16.mxu0 0
    %186 = vmatpush1.bf16.xpose.msra.mxu0 0
    %187 = vmatprep.subr.bf16.mxu0 0
    %188 = vmatpush1.bf16.xpose.msra.mxu0 0
    %189 = vmatprep.subr.bf16.mxu0 0
    %190 = vmatpush1.bf16.xpose.msra.mxu0 0
    %191 = vmatprep.subr.bf16.mxu0 0
    %192 = vmatpush1.bf16.xpose.msra.mxu0 0
    %193 = vmatprep.subr.bf16.mxu0 0
    %194 = vmatpush1.bf16.xpose.msra.mxu0 0
    %195 = vmatprep.subr.bf16.mxu0 0
    %196 = vmatpush1.bf16.xpose.msra.mxu0 0
    %197 = vmatprep.subr.bf16.mxu0 0
    %198 = vmatpush1.bf16.xpose.msra.mxu0 0
    %199 = vmatprep.subr.bf16.mxu0 0
    %200 = vmatpush1.bf16.xpose.msra.mxu0 0
    %201 = vmatprep.mubr.bf16.mxu0 %v80
    %202 = vmatmul.mubr.bf16.gmra.mrb[0].mxu0 %v78
    %v203 = vpop.f32.mrb[0].mxu0
    %v204 = vadd.f32 %v164, %v203
    %v205 = vpop.f32.mrb[0].mxu0
    %v206 = vpop.f32.mrb[0].mxu0
    %v207 = vpop.f32.mrb[0].mxu0
    %208 = vdwg.mxu0
    %209 = vmatprep.subr.bf16.mxu0 %v114
    %210 = vmatpush1.bf16.xpose.msra.mxu0 %v113
    %211 = vmatprep.subr.bf16.mxu0 0
    %212 = vmatpush1.bf16.xpose.msra.mxu0 0
    %213 = vmatprep.subr.bf16.mxu0 0
    %214 = vmatpush1.bf16.xpose.msra.mxu0 0
    %215 = vmatprep.subr.bf16.mxu0 0
    %216 = vmatpush1.bf16.xpose.msra.mxu0 0
    %217 = vmatprep.subr.bf16.mxu0 0
    %218 = vmatpush1.bf16.xpose.msra.mxu0 0
    %219 = vmatprep.subr.bf16.mxu0 0
    %220 = vmatpush1.bf16.xpose.msra.mxu0 0
    %221 = vmatprep.subr.bf16.mxu0 0
    %222 = vmatpush1.bf16.xpose.msra.mxu0 0
    %223 = vmatprep.subr.bf16.mxu0 0
    %224 = vmatpush1.bf16.xpose.msra.mxu0 0
    %225 = vmatprep.subr.bf16.mxu0 0
    %226 = vmatpush1.bf16.xpose.msra.mxu0 0
    %227 = vmatprep.subr.bf16.mxu0 0
    %228 = vmatpush1.bf16.xpose.msra.mxu0 0
    %229 = vmatprep.subr.bf16.mxu0 0
    %230 = vmatpush1.bf16.xpose.msra.mxu0 0
    %231 = vmatprep.subr.bf16.mxu0 0
    %232 = vmatpush1.bf16.xpose.msra.mxu0 0
    %233 = vmatprep.subr.bf16.mxu0 0
    %234 = vmatpush1.bf16.xpose.msra.mxu0 0
    %235 = vmatprep.subr.bf16.mxu0 0
    %236 = vmatpush1.bf16.xpose.msra.mxu0 0
    %237 = vmatprep.subr.bf16.mxu0 0
    %238 = vmatpush1.bf16.xpose.msra.mxu0 0
    %239 = vmatprep.subr.bf16.mxu0 0
    %240 = vmatpush1.bf16.xpose.msra.mxu0 0
    %241 = vmatprep.mubr.bf16.mxu0 %v77
    %242 = vmatmul.mubr.bf16.gmra.mrb[0].mxu0 %v63
    %v243 = vpop.f32.mrb[0].mxu0
    %v244 = vadd.f32 %v204, %v243
    %v245 = vpop.f32.mrb[0].mxu0
    %v246 = vpop.f32.mrb[0].mxu0
    %v247 = vpop.f32.mrb[0].mxu0
    %248 = vdwg.mxu0
    %249 = vmatprep.subr.bf16.mxu0 0
    %250 = vmatpush1.bf16.xpose.msra.mxu0 %v127
    %251 = vmatprep.subr.bf16.mxu0 0
    %252 = vmatpush1.bf16.xpose.msra.mxu0 0
    %253 = vmatprep.subr.bf16.mxu0 0
    %254 = vmatpush1.bf16.xpose.msra.mxu0 0
    %255 = vmatprep.subr.bf16.mxu0 0
    %256 = vmatpush1.bf16.xpose.msra.mxu0 0
    %257 = vmatprep.subr.bf16.mxu0 0
    %258 = vmatpush1.bf16.xpose.msra.mxu0 0
    %259 = vmatprep.subr.bf16.mxu0 0
    %260 = vmatpush1.bf16.xpose.msra.mxu0 0
    %261 = vmatprep.subr.bf16.mxu0 0
    %262 = vmatpush1.bf16.xpose.msra.mxu0 0
    %263 = vmatprep.subr.bf16.mxu0 0
    %264 = vmatpush1.bf16.xpose.msra.mxu0 0
    %265 = vmatprep.subr.bf16.mxu0 0
    %266 = vmatpush1.bf16.xpose.msra.mxu0 0
    %267 = vmatprep.subr.bf16.mxu0 0
    %268 = vmatpush1.bf16.xpose.msra.mxu0 0
    %269 = vmatprep.subr.bf16.mxu0 0
    %270 = vmatpush1.bf16.xpose.msra.mxu0 0
    %271 = vmatprep.subr.bf16.mxu0 0
    %272 = vmatpush1.bf16.xpose.msra.mxu0 0
    %273 = vmatprep.subr.bf16.mxu0 0
    %274 = vmatpush1.bf16.xpose.msra.mxu0 0
    %275 = vmatprep.subr.bf16.mxu0 0
    %276 = vmatpush1.bf16.xpose.msra.mxu0 0
    %277 = vmatprep.subr.bf16.mxu0 0
    %278 = vmatpush1.bf16.xpose.msra.mxu0 0
    %279 = vmatprep.subr.bf16.mxu0 0
    %280 = vmatpush1.bf16.xpose.msra.mxu0 0
    %281 = vmatprep.mubr.bf16.mxu0 0
    %282 = vmatmul.mubr.bf16.gmra.mrb[0].mxu0 %v124
    %v283 = vpop.f32.mrb[0].mxu0
    %v284 = vadd.f32 %v244, %v283
    %v285 = vpop.f32.mrb[0].mxu0
    %v286 = vpop.f32.mrb[0].mxu0
    %v287 = vpop.f32.mrb[0].mxu0
    %288 = vdwg.mxu0
    %vm289 = vcmask 74752
    %290 = vst.msk [vmem:[#allocation2] sm:$0x3] %vm289, %v284
    // Predicated region
    $region14: #{cnn_forward.5} parent=1 // pred_check
      _
    $region15: #{cnn_forward.5} parent=1 // pred_check_branch
      %292 = sbr.rel (0) target = $region17
    $region16: #{cnn_forward.5} parent=1 // pred_region
      %s294 = ssub.s32 32, 32
      %295 = vsyncadd [#allocation3], %s294
      %s297 = sshll.u32 [#allocation2], 4
      %s298 = int_to_ptr.vmem [resolvable:$true] %s297
      %300 = dma.vmem_to_hbm [thread:$0]  %s298, 32, %s3, [#allocation3]
    $region17: #{cnn_forward.5} parent=1 // pred_fallthru
      _
    // Predicated region
    $region18: #{cnn_forward.5} parent=1 // pred_check
      _
    $region19: #{cnn_forward.5} parent=1 // pred_check_branch
      %302 = sbr.rel (0) target = $region21
    $region20: #{cnn_forward.5} parent=1 // pred_region
      %303 = dma.done [#allocation3], 32
    $region21: #{cnn_forward.5} parent=1 // pred_fallthru
      _
    %304 = vsyncpa [#allocation3], 1

</llo_original>
